<compile_context>
chip_gen: v5e
topology: v5e:2x2
jax: 0.10.0
libtpu: 0.0.40
codegen_flags: <defaults>
</compile_context>

<pallas_src>
import functools

import jax
import jax.numpy as jnp
from jax import lax
from jax.experimental import pallas as pl
from jax.experimental.pallas import tpu as pltpu

BN_EPS = 1e-5


def _round_up(x, m):
    return ((x + m - 1) // m) * m


def _round_down(x, m):
    return (x // m) * m


# ---------------------------------------------------------------------------
# Generation-gated tuning (alignment, default tile_m, scoped VMEM limit).
# ---------------------------------------------------------------------------
def _tpu_tuning():
    kind = ""
    try:
        kind = jax.devices()[0].device_kind.lower()
    except Exception:
        pass
    vmem_cap = None
    try:
        vmem_cap = int(pltpu.get_tpu_info().vmem_capacity_bytes)
    except Exception:
        pass
    if vmem_cap is None:
        vmem_cap = (64 if "v7" in kind else 128) * 1024 * 1024

    # v6e / v7x MXU passes are 256x256 -> pad K / C_out to 256; v5e is 128x128.
    align = 256 if ("v6" in kind or "v7" in kind) else 128

    if "v7" in kind or vmem_cap <= 64 * 1024 * 1024:
        # v7x: 64 MiB VMEM per TensorCore -> explicit conservative budget.
        vmem_limit = min(vmem_cap, 48 * 1024 * 1024)
        tile_m_default = 512
    elif vmem_cap >= 100 * 1024 * 1024:
        # v5e / v6e: 128 MiB physical VMEM -> fatter tiles, higher scoped limit.
        vmem_limit = 96 * 1024 * 1024
        tile_m_default = 1024
    else:
        vmem_limit = 32 * 1024 * 1024
        tile_m_default = 512
    return align, tile_m_default, vmem_limit


def _choose_tiles(m, k_pad, c_pad, align, tile_m_req, vmem_limit, materialize):
    """Pick (tile_m, tile_k) fitting the per-generation VMEM budget."""
    # Largest multiple-of-`align` divisor of k_pad, capped per grid step.
    max_tk = 8 * align
    tile_k = align
    t = align
    while t <= min(k_pad, max_tk):
        if k_pad % t == 0:
            tile_k = t
        t += align

    tile_m = min(int(tile_m_req), _round_up(m, 128))
    if m >= 512:
        # Ensure >=2 M-tiles so the "parallel" M axis gives both v7x
        # TensorCores work even for mid-sized layers.
        tile_m = min(tile_m, max(128, _round_down(_round_up(m, 128) // 2, 128)))
    tile_m = max(128, _round_down(tile_m, 128))

    budget = int(0.70 * vmem_limit)

    def usage(tm, tk):
        patches = 2 * tm * tk * 2                      # bf16, double-buffered
        weight = 2 * tk * c_pad * 2                    # bf16, double-buffered over K
        acc = tm * c_pad * 4                           # f32 scratch accumulator
        y_pass = (2 * tm * c_pad * 2) if materialize else 0   # bf16 y in/out
        out = 2 * tm * c_pad * 4                       # f32 output, double-buffered
        small = 16 * c_pad * 4                         # stats / scale / bias
        return patches + weight + acc + y_pass + out + small

    while usage(tile_m, tile_k) > budget and tile_m > 128:
        tile_m = max(128, _round_down(tile_m // 2, 128))
    while usage(tile_m, tile_k) > budget and tile_k > align:
        nk = tile_k - align
        while nk > align and k_pad % nk != 0:
            nk -= align
        tile_k = max(align, nk)
    return tile_m, tile_k


# ---------------------------------------------------------------------------
# Phase-1 kernels: conv-as-matmul on the MXU (bf16 operands, f32 accumulation
# in a VMEM scratch, K tiled on the innermost "arbitrary" axis) + per-M-tile
# BN partial sums. Stats always come from the f32 accumulator.
# ---------------------------------------------------------------------------
def _stats_kernel(patches_ref, w_ref, sum_ref, sumsq_ref, acc_ref):
    kk = pl.program_id(1)

    @pl.when(kk == 0)
    def _():
        acc_ref[...] = jnp.zeros_like(acc_ref)

    acc_ref[...] += jnp.dot(patches_ref[...], w_ref[...],
                            preferred_element_type=jnp.float32)

    @pl.when(kk == pl.num_programs(1) - 1)
    def _():
        y = acc_ref[...]
        # Direct row stores (no concatenate / relayout in the epilogue).
        # TODO(synk): Welford/Chan per-tile (mean, M2) combine if very
        # large-magnitude activations ever make sum/sumsq cancellation matter.
        sum_ref[0] = jnp.sum(y, axis=0, keepdims=True)
        sumsq_ref[0] = jnp.sum(y * y, axis=0, keepdims=True)


def _conv_stats_kernel(patches_ref, w_ref, y_ref, sum_ref, sumsq_ref, acc_ref):
    kk = pl.program_id(1)

    @pl.when(kk == 0)
    def _():
        acc_ref[...] = jnp.zeros_like(acc_ref)

    acc_ref[...] += jnp.dot(patches_ref[...], w_ref[...],
                            preferred_element_type=jnp.float32)

    @pl.when(kk == pl.num_programs(1) - 1)
    def _():
        y = acc_ref[...]
        y_ref[...] = y.astype(y_ref.dtype)        # bf16 intermediate to HBM
        sum_ref[0] = jnp.sum(y, axis=0, keepdims=True)
        sumsq_ref[0] = jnp.sum(y * y, axis=0, keepdims=True)


# ---------------------------------------------------------------------------
# Phase-2 kernels.
# ---------------------------------------------------------------------------
def _bn_silu_kernel(y_ref, scale_ref, bias_ref, out_ref):
    z = y_ref[...].astype(jnp.float32) * scale_ref[...] + bias_ref[...]
    sig = pl.reciprocal(1.0 + jnp.exp(-z), approx=True)   # EUP exp + EUP recip
    out_ref[...] = (z * sig).astype(out_ref.dtype)


def _conv_bn_silu_kernel(patches_ref, w_ref, scale_ref, bias_ref, out_ref,
                         acc_ref):
    kk = pl.program_id(1)

    @pl.when(kk == 0)
    def _():
        acc_ref[...] = jnp.zeros_like(acc_ref)

    acc_ref[...] += jnp.dot(patches_ref[...], w_ref[...],
                            preferred_element_type=jnp.float32)

    @pl.when(kk == pl.num_programs(1) - 1)
    def _():
        z = acc_ref[...] * scale_ref[...] + bias_ref[...]
        sig = pl.reciprocal(1.0 + jnp.exp(-z), approx=True)
        out_ref[...] = (z * sig).astype(out_ref.dtype)


# ---------------------------------------------------------------------------
# XLA-side glue.
# ---------------------------------------------------------------------------
def _im2col_nhwc(x_nhwc, kh, kw, stride, padding):
    """Patch extraction in the *input* dtype (call with bf16 so the KH*KW-times
    larger patch matrix is written to HBM at half width).
    Returns ([M, KH*KW*C_in], (N, Ho, Wo))."""
    # TODO(synk): implicit GEMM (halo-tiled NHWC slab DMA'd per grid step with
    # the KH*KW shifted views assembled in-kernel) would remove this KH*KW x
    # larger HBM materialization entirely.
    x = jnp.pad(x_nhwc, ((0, 0), (padding, padding), (padding, padding), (0, 0)))
    n, h, w, c = x.shape
    ho = (h - kh) // stride + 1
    wo = (w - kw) // stride + 1
    cols = []
    for i in range(kh):
        for j in range(kw):
            cols.append(x[:, i:i + stride * ho:stride, j:j + stride * wo:stride, :])
    p = jnp.stack(cols, axis=3)                    # (kh, kw) major, C_in minor
    return p.reshape(n * ho * wo, kh * kw * c), (n, ho, wo)


@functools.partial(
    jax.jit,
    static_argnames=("kernel_size", "stride", "padding", "tile_m", "force_mode"))
def conv_block_forward_nhwc(x_nhwc, weight, gamma, beta, *, kernel_size, stride,
                            padding, tile_m=None, force_mode=None):
    """ConvBlock forward (groups=1, bn=True, act=True) on NHWC input/output.

    x_nhwc : [N, H, W, C_in] f32    weight : [C_out, C_in, KH, KW] (bias=False)
    gamma, beta : [C_out]           returns [N, Ho, Wo, C_out] f32
    """
    # TODO(synk): groups > 1 (grouped conv) not implemented; covers groups=1.
    kh = kw = kernel_size
    c_out, c_in, _, _ = weight.shape

    align, tile_m_default, vmem_limit = _tpu_tuning()
    if tile_m is None:
        tile_m = tile_m_default

    # --- im2col in bf16 (pad + cast folded; halves the dominant HBM pass) ---
    patches, (n, ho, wo) = _im2col_nhwc(x_nhwc.astype(jnp.bfloat16),
                                        kh, kw, stride, padding)
    m, k = patches.shape

    k_pad = _round_up(k, align)
    c_pad = _round_up(c_out, align)

    # Path selection: for small K the matmul is cheap relative to HBM, so we
    # recompute it in phase 2 fused with BN+SiLU (no y intermediate in HBM).
    if force_mode is None:
        materialize = k_pad > min(2 * c_pad, 1024)
    else:
        materialize = (force_mode == "materialize")

    tile_m, tile_k = _choose_tiles(m, k_pad, c_pad, align, tile_m, vmem_limit,
                                   materialize)
    m_pad = _round_up(max(m, tile_m), tile_m)
    nt_m = m_pad // tile_m
    nt_k = k_pad // tile_k

    patches_p = jnp.pad(patches, ((0, m_pad - m), (0, k_pad - k)))      # bf16
    w_mat = jnp.transpose(weight, (2, 3, 1, 0)).reshape(k, c_out)       # (kh,kw,ci)->K
    w_p = jnp.pad(w_mat.astype(jnp.float32),
                  ((0, k_pad - k), (0, c_pad - c_out))).astype(jnp.bfloat16)
    gamma_p = jnp.pad(gamma.astype(jnp.float32), (0, c_pad - c_out))
    beta_p = jnp.pad(beta.astype(jnp.float32), (0, c_pad - c_out))

    mk_params = pltpu.CompilerParams(
        dimension_semantics=("parallel", "arbitrary"),
        vmem_limit_bytes=vmem_limit)

    patches_spec = pl.BlockSpec((tile_m, tile_k), lambda i, kk: (i, kk))
    w_spec = pl.BlockSpec((tile_k, c_pad), lambda i, kk: (kk, 0))
    stat_spec = pl.BlockSpec((1, 1, c_pad), lambda i, kk: (i, 0, 0))
    stat_shape = jax.ShapeDtypeStruct((nt_m, 1, c_pad), jnp.float32)
    acc_scratch = pltpu.VMEM((tile_m, c_pad), jnp.float32)

    # --- phase 1: conv matmul (+ optional bf16 y) + per-tile BN partials ----
    if materialize:
        y_full, sums, sumsqs = pl.pallas_call(
            _conv_stats_kernel,
            out_shape=(jax.ShapeDtypeStruct((m_pad, c_pad), jnp.bfloat16),
                       stat_shape, stat_shape),
            grid=(nt_m, nt_k),
            in_specs=[patches_spec, w_spec],
            out_specs=(pl.BlockSpec((tile_m, c_pad), lambda i, kk: (i, 0)),
                       stat_spec, stat_spec),
            scratch_shapes=[acc_scratch],
            compiler_params=mk_params,
        )(patches_p, w_p)
    else:
        sums, sumsqs = pl.pallas_call(
            _stats_kernel,
            out_shape=(stat_shape, stat_shape),
            grid=(nt_m, nt_k),
            in_specs=[patches_spec, w_spec],
            out_specs=(stat_spec, stat_spec),
            scratch_shapes=[acc_scratch],
            compiler_params=mk_params,
        )(patches_p, w_p)

    # --- fold batch stats into per-channel scale/bias (tiny XLA epilogue) ---
    # Zero-padded rows/channels contribute nothing to the sums; divide by the
    # real count m = N*Ho*Wo (training-mode BatchNorm2d, biased variance).
    inv_m = 1.0 / float(m)
    mean = jnp.sum(sums[:, 0, :], axis=0) * inv_m
    var = jnp.maximum(jnp.sum(sumsqs[:, 0, :], axis=0) * inv_m - mean * mean, 0.0)
    inv_std = lax.rsqrt(var + BN_EPS)
    scale = (gamma_p * inv_std).reshape(1, c_pad)
    bias = (beta_p - mean * gamma_p * inv_std).reshape(1, c_pad)

    # --- phase 2: BN affine + SiLU (fully parallel over M tiles) ------------
    if materialize:
        out_full = pl.pallas_call(
            _bn_silu_kernel,
            out_shape=jax.ShapeDtypeStruct((m_pad, c_pad), jnp.float32),
            grid=(nt_m,),
            in_specs=[pl.BlockSpec((tile_m, c_pad), lambda i: (i, 0)),
                      pl.BlockSpec((1, c_pad), lambda i: (0, 0)),
                      pl.BlockSpec((1, c_pad), lambda i: (0, 0))],
            out_specs=pl.BlockSpec((tile_m, c_pad), lambda i: (i, 0)),
            compiler_params=pltpu.CompilerParams(
                dimension_semantics=("parallel",),
                vmem_limit_bytes=vmem_limit),
        )(y_full, scale, bias)
    else:
        out_full = pl.pallas_call(
            _conv_bn_silu_kernel,
            out_shape=jax.ShapeDtypeStruct((m_pad, c_pad), jnp.float32),
            grid=(nt_m, nt_k),
            in_specs=[patches_spec, w_spec,
                      pl.BlockSpec((1, c_pad), lambda i, kk: (0, 0)),
                      pl.BlockSpec((1, c_pad), lambda i, kk: (0, 0))],
            out_specs=pl.BlockSpec((tile_m, c_pad), lambda i, kk: (i, 0)),
            scratch_shapes=[acc_scratch],
            compiler_params=mk_params,
        )(patches_p, w_p, scale, bias)

    return out_full[:m, :c_out].reshape(n, ho, wo, c_out)


@functools.partial(
    jax.jit,
    static_argnames=("kernel_size", "stride", "padding", "tile_m", "force_mode"))
def conv_block_forward(x_nchw, weight, gamma, beta, *, kernel_size, stride,
                       padding, tile_m=None, force_mode=None):
    """PyTorch-parity wrapper: NCHW in / NCHW out.

    Prefer conv_block_forward_nhwc when producer/consumer are NHWC -- each
    layout transpose here is a full extra HBM pass in XLA.
    """
    x_nhwc = jnp.transpose(x_nchw, (0, 2, 3, 1))
    out_nhwc = conv_block_forward_nhwc(
        x_nhwc, weight, gamma, beta, kernel_size=kernel_size, stride=stride,
        padding=padding, tile_m=tile_m, force_mode=force_mode)
    return jnp.transpose(out_nhwc, (0, 3, 1, 2))


def _reference_forward(x_nchw, weight, gamma, beta, *, stride, padding):
    """Pure-JAX reference (conv + training-mode BN + SiLU) for validation."""
    y = lax.conv_general_dilated(
        x_nchw.astype(jnp.float32), weight.astype(jnp.float32),
        window_strides=(stride, stride),
        padding=[(padding, padding), (padding, padding)],
        dimension_numbers=("NCHW", "OIHW", "NCHW"))
    mean = jnp.mean(y, axis=(0, 2, 3), keepdims=True)
    var = jnp.mean((y - mean) ** 2, axis=(0, 2, 3), keepdims=True)
    z = (y - mean) / jnp.sqrt(var + BN_EPS)
    z = z * gamma.reshape(1, -1, 1, 1) + beta.reshape(1, -1, 1, 1)
    return z * jax.nn.sigmoid(z)


if __name__ == "__main__":
    # ConvBlock(in_chn=4, out_chn=8, kernel_size=3, stride=1, padding=1)
    N, C_IN, H, W = 2, 4, 16, 16
    C_OUT, KSIZE, STRIDE, PAD = 8, 3, 1, 1

    key = jax.random.PRNGKey(0)
    kx, kw_ = jax.random.split(key)
    x = jax.random.normal(kx, (N, C_IN, H, W), dtype=jnp.float32)
    weight = 0.1 * jax.random.normal(kw_, (C_OUT, C_IN, KSIZE, KSIZE),
                                     dtype=jnp.float32)
    gamma = jnp.ones((C_OUT,), dtype=jnp.float32)
    beta = jnp.zeros((C_OUT,), dtype=jnp.float32)

    ref = _reference_forward(x, weight, gamma, beta, stride=STRIDE, padding=PAD)

    # tile_m=128 -> multi-step M grid even at toy size, exercising the tiled /
    # pipelined path and the partial-stat combination. Exercise both
    # trace-time paths: fused-recompute (no y intermediate) and the
    # materialized bf16-y two-phase path.
    for mode in ("recompute", "materialize"):
        out = conv_block_forward(x, weight, gamma, beta,
                                 kernel_size=KSIZE, stride=STRIDE, padding=PAD,
                                 tile_m=128, force_mode=mode)
        out = jax.block_until_ready(out)
        assert out.shape == (N, C_OUT, H, W), out.shape
        # Tolerance covers intentional bf16 MXU operands + approx-EUP sigmoid.
        assert jnp.allclose(out, ref, atol=2e-2, rtol=2e-2), f"mismatch ({mode})"

    print("KERNEL_OK")
</pallas_src>

<mosaic_0001>
module attributes {stable_mosaic.version = 11 : i64} {
  func.func @_conv_bn_silu_kernel(%arg0: i32, %arg1: i32, %arg2: memref<128x128xbf16, #tpu.memory_space<vmem>>, %arg3: memref<128x128xbf16, #tpu.memory_space<vmem>>, %arg4: memref<1x128xf32, #tpu.memory_space<vmem>>, %arg5: memref<1x128xf32, #tpu.memory_space<vmem>>, %arg6: memref<128x128xf32, #tpu.memory_space<vmem>>, %arg7: memref<128x128xf32, #tpu.memory_space<vmem>>) attributes {dimension_semantics = [#tpu.dimension_semantics<parallel>, #tpu.dimension_semantics<arbitrary>], iteration_bounds = array<i64: 4, 1>, scalar_prefetch = 0 : i64, scratch_operands = 1 : i64, tpu.core_type = #tpu.core_type<tc>, window_params = [{transform_indices = @transform_0, window_bounds = array<i64: 128, 128>}, {transform_indices = @transform_1, window_bounds = array<i64: 128, 128>}, {pipeline_mode = #tpu.pipeline_mode<synchronous>, transform_indices = @transform_2, window_bounds = array<i64: 1, 128>}, {pipeline_mode = #tpu.pipeline_mode<synchronous>, transform_indices = @transform_3, window_bounds = array<i64: 1, 128>}, {transform_indices = @transform_4, window_bounds = array<i64: 128, 128>}]} {
    %c0_i32 = arith.constant 0 : i32
    %0 = arith.cmpi eq, %arg1, %c0_i32 : i32
    %1 = arith.extui %0 : i1 to i32
    %c0_i32_0 = arith.constant 0 : i32
    %2 = arith.cmpi ne, %1, %c0_i32_0 : i32
    scf.if %2 {
      %cst_10 = arith.constant 0.000000e+00 : f32
      %12 = vector.broadcast %cst_10 : f32 to vector<128x128xf32>
      %c0_11 = arith.constant 0 : index
      %c0_12 = arith.constant 0 : index
      %13 = vector.load %arg7[%c0_11, %c0_12] : memref<128x128xf32, #tpu.memory_space<vmem>>, vector<128x128xf32>
      tpu.vector_store %arg7[%c0_11, %c0_12], %12 {strides = array<i32>} : memref<128x128xf32, #tpu.memory_space<vmem>>, vector<128x128xf32>,
    } else {
    }
    %c0 = arith.constant 0 : index
    %c0_1 = arith.constant 0 : index
    %3 = vector.load %arg7[%c0, %c0_1] : memref<128x128xf32, #tpu.memory_space<vmem>>, vector<128x128xf32>
    %c0_2 = arith.constant 0 : index
    %c0_3 = arith.constant 0 : index
    %4 = vector.load %arg2[%c0_2, %c0_3] : memref<128x128xbf16, #tpu.memory_space<vmem>>, vector<128x128xbf16>
    %c0_4 = arith.constant 0 : index
    %c0_5 = arith.constant 0 : index
    %5 = vector.load %arg3[%c0_4, %c0_5] : memref<128x128xbf16, #tpu.memory_space<vmem>>, vector<128x128xbf16>
    %cst = arith.constant dense<0.000000e+00> : vector<128x128xf32>
    %6 = tpu.matmul %4, %5, %cst {dimension_numbers = #tpu.dot_dimension_numbers<[1], [0], [0], [1], [0, 0, 1, 1], [], []>} : vector<128x128xbf16>, vector<128x128xbf16>, vector<128x128xf32> -> vector<128x128xf32>
    %7 = arith.addf %3, %6 : vector<128x128xf32>
    %c0_6 = arith.constant 0 : index
    %c0_7 = arith.constant 0 : index
    %8 = vector.load %arg7[%c0_6, %c0_7] : memref<128x128xf32, #tpu.memory_space<vmem>>, vector<128x128xf32>
    tpu.vector_store %arg7[%c0_6, %c0_7], %7 {strides = array<i32>} : memref<128x128xf32, #tpu.memory_space<vmem>>, vector<128x128xf32>,
    %c0_i32_8 = arith.constant 0 : i32
    %9 = arith.cmpi eq, %arg1, %c0_i32_8 : i32
    %10 = arith.extui %9 : i1 to i32
    %c0_i32_9 = arith.constant 0 : i32
    %11 = arith.cmpi ne, %10, %c0_i32_9 : i32
    scf.if %11 {
      %c0_10 = arith.constant 0 : index
      %c0_11 = arith.constant 0 : index
      %12 = vector.load %arg7[%c0_10, %c0_11] : memref<128x128xf32, #tpu.memory_space<vmem>>, vector<128x128xf32>
      %c0_12 = arith.constant 0 : index
      %c0_13 = arith.constant 0 : index
      %13 = vector.load %arg4[%c0_12, %c0_13] : memref<1x128xf32, #tpu.memory_space<vmem>>, vector<1x128xf32>
      %14 = vector.broadcast %13 : vector<1x128xf32> to vector<128x128xf32>
      %15 = arith.mulf %12, %14 : vector<128x128xf32>
      %c0_14 = arith.constant 0 : index
      %c0_15 = arith.constant 0 : index
      %16 = vector.load %arg5[%c0_14, %c0_15] : memref<1x128xf32, #tpu.memory_space<vmem>>, vector<1x128xf32>
      %17 = vector.broadcast %16 : vector<1x128xf32> to vector<128x128xf32>
      %18 = arith.addf %15, %17 : vector<128x128xf32>
      %cst_16 = arith.constant 0.000000e+00 : f32
      %19 = vector.broadcast %cst_16 : f32 to vector<128x128xf32>
      %20 = arith.subf %19, %18 : vector<128x128xf32>
      %21 = math.exp %20 : vector<128x128xf32>
      %cst_17 = arith.constant 1.000000e+00 : f32
      %22 = vector.broadcast %cst_17 : f32 to vector<128x128xf32>
      %23 = arith.addf %22, %21 : vector<128x128xf32>
      %24 = tpu.reciprocal %23 {approx = true} : vector<128x128xf32> -> vector<128x128xf32>
      %25 = arith.mulf %18, %24 : vector<128x128xf32>
      %c0_18 = arith.constant 0 : index
      %c0_19 = arith.constant 0 : index
      %26 = vector.load %arg6[%c0_18, %c0_19] : memref<128x128xf32, #tpu.memory_space<vmem>>, vector<128x128xf32>
      tpu.vector_store %arg6[%c0_18, %c0_19], %25 {strides = array<i32>} : memref<128x128xf32, #tpu.memory_space<vmem>>, vector<128x128xf32>,
    } else {
    }
    return
  }
  func.func @transform_0(%arg0: i32, %arg1: i32) -> (i32, i32) {
    %c0_i32 = arith.constant 0 : i32
    return %arg0, %arg1 : i32, i32
  }
  func.func @transform_1(%arg0: i32, %arg1: i32) -> (i32, i32) {
    %c0_i32 = arith.constant 0 : i32
    %c0_i32_0 = arith.constant 0 : i32
    return %arg1, %c0_i32 : i32, i32
  }
  func.func @transform_2(%arg0: i32, %arg1: i32) -> (i32, i32) {
    %c0_i32 = arith.constant 0 : i32
    %c0_i32_0 = arith.constant 0 : i32
    %c0_i32_1 = arith.constant 0 : i32
    return %c0_i32, %c0_i32_0 : i32, i32
  }
  func.func @transform_3(%arg0: i32, %arg1: i32) -> (i32, i32) {
    %c0_i32 = arith.constant 0 : i32
    %c0_i32_0 = arith.constant 0 : i32
    %c0_i32_1 = arith.constant 0 : i32
    return %c0_i32, %c0_i32_0 : i32, i32
  }
  func.func @transform_4(%arg0: i32, %arg1: i32) -> (i32, i32) {
    %c0_i32 = arith.constant 0 : i32
    %c0_i32_0 = arith.constant 0 : i32
    return %arg0, %c0_i32 : i32, i32
  }
}

module attributes {stable_mosaic.version = 11 : i64} {
  func.func @_stats_kernel(%arg0: i32, %arg1: i32, %arg2: memref<128x128xbf16, #tpu.memory_space<vmem>>, %arg3: memref<128x128xbf16, #tpu.memory_space<vmem>>, %arg4: memref<1x1x128xf32, #tpu.memory_space<vmem>>, %arg5: memref<1x1x128xf32, #tpu.memory_space<vmem>>, %arg6: memref<128x128xf32, #tpu.memory_space<vmem>>) attributes {dimension_semantics = [#tpu.dimension_semantics<parallel>, #tpu.dimension_semantics<arbitrary>], iteration_bounds = array<i64: 4, 1>, scalar_prefetch = 0 : i64, scratch_operands = 1 : i64, tpu.core_type = #tpu.core_type<tc>, window_params = [{transform_indices = @transform_0, window_bounds = array<i64: 128, 128>}, {transform_indices = @transform_1, window_bounds = array<i64: 128, 128>}, {transform_indices = @transform_2, window_bounds = array<i64: 1, 1, 128>}, {transform_indices = @transform_3, window_bounds = array<i64: 1, 1, 128>}]} {
    %c0_i32 = arith.constant 0 : i32
    %0 = arith.cmpi eq, %arg1, %c0_i32 : i32
    %1 = arith.extui %0 : i1 to i32
    %c0_i32_0 = arith.constant 0 : i32
    %2 = arith.cmpi ne, %1, %c0_i32_0 : i32
    scf.if %2 {
      %cst_10 = arith.constant 0.000000e+00 : f32
      %12 = vector.broadcast %cst_10 : f32 to vector<128x128xf32>
      %c0_11 = arith.constant 0 : index
      %c0_12 = arith.constant 0 : index
      %13 = vector.load %arg6[%c0_11, %c0_12] : memref<128x128xf32, #tpu.memory_space<vmem>>, vector<128x128xf32>
      tpu.vector_store %arg6[%c0_11, %c0_12], %12 {strides = array<i32>} : memref<128x128xf32, #tpu.memory_space<vmem>>, vector<128x128xf32>,
    } else {
    }
    %c0 = arith.constant 0 : index
    %c0_1 = arith.constant 0 : index
    %3 = vector.load %arg6[%c0, %c0_1] : memref<128x128xf32, #tpu.memory_space<vmem>>, vector<128x128xf32>
    %c0_2 = arith.constant 0 : index
    %c0_3 = arith.constant 0 : index
    %4 = vector.load %arg2[%c0_2, %c0_3] : memref<128x128xbf16, #tpu.memory_space<vmem>>, vector<128x128xbf16>
    %c0_4 = arith.constant 0 : index
    %c0_5 = arith.constant 0 : index
    %5 = vector.load %arg3[%c0_4, %c0_5] : memref<128x128xbf16, #tpu.memory_space<vmem>>, vector<128x128xbf16>
    %cst = arith.constant dense<0.000000e+00> : vector<128x128xf32>
    %6 = tpu.matmul %4, %5, %cst {dimension_numbers = #tpu.dot_dimension_numbers<[1], [0], [0], [1], [0, 0, 1, 1], [], []>} : vector<128x128xbf16>, vector<128x128xbf16>, vector<128x128xf32> -> vector<128x128xf32>
    %7 = arith.addf %3, %6 : vector<128x128xf32>
    %c0_6 = arith.constant 0 : index
    %c0_7 = arith.constant 0 : index
    %8 = vector.load %arg6[%c0_6, %c0_7] : memref<128x128xf32, #tpu.memory_space<vmem>>, vector<128x128xf32>
    tpu.vector_store %arg6[%c0_6, %c0_7], %7 {strides = array<i32>} : memref<128x128xf32, #tpu.memory_space<vmem>>, vector<128x128xf32>,
    %c0_i32_8 = arith.constant 0 : i32
    %9 = arith.cmpi eq, %arg1, %c0_i32_8 : i32
    %10 = arith.extui %9 : i1 to i32
    %c0_i32_9 = arith.constant 0 : i32
    %11 = arith.cmpi ne, %10, %c0_i32_9 : i32
    scf.if %11 {
      %c0_10 = arith.constant 0 : index
      %c0_11 = arith.constant 0 : index
      %12 = vector.load %arg6[%c0_10, %c0_11] : memref<128x128xf32, #tpu.memory_space<vmem>>, vector<128x128xf32>
      %cst_12 = arith.constant dense<0.000000e+00> : vector<128xf32>
      %13 = vector.multi_reduction <add>, %12, %cst_12 [0] : vector<128x128xf32> to vector<128xf32>
      %14 = vector.shape_cast %13 : vector<128xf32> to vector<1x128xf32>
      %c0_13 = arith.constant 0 : index
      %c0_14 = arith.constant 0 : index
      %c0_15 = arith.constant 0 : index
      %15 = vector.load %arg4[%c0_13, %c0_14, %c0_15] : memref<1x1x128xf32, #tpu.memory_space<vmem>>, vector<1x1x128xf32>
      %16 = vector.shape_cast %15 : vector<1x1x128xf32> to vector<1x128xf32>
      %17 = vector.shape_cast %14 : vector<1x128xf32> to vector<1x1x128xf32>
      tpu.vector_store %arg4[%c0_13, %c0_14, %c0_15], %17 {strides = array<i32>} : memref<1x1x128xf32, #tpu.memory_space<vmem>>, vector<1x1x128xf32>,
      %18 = arith.mulf %12, %12 : vector<128x128xf32>
      %cst_16 = arith.constant dense<0.000000e+00> : vector<128xf32>
      %19 = vector.multi_reduction <add>, %18, %cst_16 [0] : vector<128x128xf32> to vector<128xf32>
      %20 = vector.shape_cast %19 : vector<128xf32> to vector<1x128xf32>
      %c0_17 = arith.constant 0 : index
      %c0_18 = arith.constant 0 : index
      %c0_19 = arith.constant 0 : index
      %21 = vector.load %arg5[%c0_17, %c0_18, %c0_19] : memref<1x1x128xf32, #tpu.memory_space<vmem>>, vector<1x1x128xf32>
      %22 = vector.shape_cast %21 : vector<1x1x128xf32> to vector<1x128xf32>
      %23 = vector.shape_cast %20 : vector<1x128xf32> to vector<1x1x128xf32>
      tpu.vector_store %arg5[%c0_17, %c0_18, %c0_19], %23 {strides = array<i32>} : memref<1x1x128xf32, #tpu.memory_space<vmem>>, vector<1x1x128xf32>,
    } else {
    }
    return
  }
  func.func @transform_0(%arg0: i32, %arg1: i32) -> (i32, i32) {
    %c0_i32 = arith.constant 0 : i32
    return %arg0, %arg1 : i32, i32
  }
  func.func @transform_1(%arg0: i32, %arg1: i32) -> (i32, i32) {
    %c0_i32 = arith.constant 0 : i32
    %c0_i32_0 = arith.constant 0 : i32
    return %arg1, %c0_i32 : i32, i32
  }
  func.func @transform_2(%arg0: i32, %arg1: i32) -> (i32, i32, i32) {
    %c0_i32 = arith.constant 0 : i32
    %c0_i32_0 = arith.constant 0 : i32
    %c0_i32_1 = arith.constant 0 : i32
    return %arg0, %c0_i32, %c0_i32_0 : i32, i32, i32
  }
  func.func @transform_3(%arg0: i32, %arg1: i32) -> (i32, i32, i32) {
    %c0_i32 = arith.constant 0 : i32
    %c0_i32_0 = arith.constant 0 : i32
    %c0_i32_1 = arith.constant 0 : i32
    return %arg0, %c0_i32, %c0_i32_0 : i32, i32, i32
  }
}

</mosaic_0001>

<llo_original>
// kernel: conv_block_forward_nhwc.3
$region0: #{conv_block_forward_nhwc.3}
  #allocation0 [shape = 'u32[]', space=smem, size = 0x4, offset = 0x4, fixed_abs, tag = 'smem constant byte address 0x4 - core index']
  #allocation1 [shape = 'u32[72,128]{1,0:T(1,128)}', space=vmem, size = 0x9000, scoped, tag = 'internal scratch']
  #allocation2 [shape = 'f32[128,128]{1,0:T(8,128)}', space=vmem, size = 0x10000, scoped, tag = 'scratch operand']
  %s0 = inlined_call_operand.vmem [shape: bf16[512,128], index: 0, kind: input, shape index: {}]
  %s1 = inlined_call_operand.vmem [shape: bf16[128,128], index: 1, kind: input, shape index: {}]
  %s2 = inlined_call_operand.vmem [shape: f32[1,128], index: 2, kind: input, shape index: {}]
  %s3 = inlined_call_operand.vmem [shape: f32[1,128], index: 3, kind: input, shape index: {}]
  %s4 = inlined_call_operand.vmem [shape: f32[512,128], index: 4, kind: output, shape index: {}]
  %s5 = sld [smem:[#allocation0]]
  $region57: #{conv_block_forward_nhwc.3} parent=0
    _
  %s7 = ssub.s32 1, %s5
  %s8 = scalar_select 0, %s7, %s5
  loop: start=0, step=1, limit=6
  $region2: #{conv_block_forward_nhwc.3} parent=0 // loop_pre_header
    _
  $region3: #{conv_block_forward_nhwc.3} parent=0 // loop_header
    %s10 = sphi 0, %s14
    %p11 = scmp.ge.s32.totalorder %s10, 6
    %s17 = sphi 0, %s29
    %s18 = sphi 0, %s25
    %s19 = sphi 0, %s17
    %s20 = sphi 0, %s18
    %s21 = sphi 0, %s19
    %s22 = sphi 0, %s20
    %s34 = sphi 0, %s36
    %s37 = sphi 0, %s34
    %s38 = sphi 0, %s37
    %s54 = sphi 0, %s38
    %s60 = sphi 0, %s62
    %s63 = sphi 0, %s60
    %s64 = sphi 0, %s63
    %s80 = sphi 0, %s64
    %s84 = sphi 0, %s84
    %s86 = sphi 0, %s84
    %s87 = sphi 0, %s86
    %s101 = sphi 0, %s87
    %s105 = sphi 0, %s105
    %s107 = sphi 0, %s105
    %s108 = sphi 0, %s107
    %s122 = sphi 0, %s108
    %s128 = sphi 0, %s130
    %s131 = sphi 0, %s128
    %s132 = sphi 0, %s131
    %s148 = sphi 0, %s132
  $region4: #{conv_block_forward_nhwc.3} parent=0 // loop_header_branch
    %13 = sbr.rel (%p11) target = $region8
  $region5: #{conv_block_forward_nhwc.3} parent=0 // loop_body
    %s15 = ssub.s32 %s10, 1
    %s16 = ssub.s32 %s10, 2
    %s23 = sadd.s32 1, %s18
    %p24 = scmp.ge.s32.totalorder %s23, 1
    %s25 = scalar_select %p24, 0, %s23
    %s26 = sadd.s32 1, %s17
    %s27 = scalar_select %p24, %s26, %s17
    %p28 = scmp.ge.s32.totalorder %s27, 4
    %s29 = scalar_select %p28, 0, %s27
    %s30 = ssub.s32 %s17, %s29
    %s31 = ssub.s32 %s18, %s25
    %s32 = sor.u32 %s30, %s31
    %p33 = scmp.eq.s32.totalorder %s32, 0
    %s35 = sadd.s32 %s34, 1
    %s36 = scalar_select %p33, %s34, %s35
    %p39 = pneg %p33
    %p40 = scmp.eq.s32.totalorder %s10, 3
    %p41 = por %p39, %p40
    %p42 = scmp.ne.s32.totalorder %s34, %s37
    %p43 = scmp.eq.s32.totalorder %s10, 0
    %p44 = por %p42, %p43
    %p45 = scmp.ne.s32.totalorder %s34, %s37
    %p46 = scmp.eq.s32.totalorder %s15, 3
    %p47 = por %p45, %p46
    %p48 = scmp.ne.s32.totalorder %s37, %s38
    %p49 = scmp.eq.s32.totalorder %s15, 0
    %p50 = por %p48, %p49
    %p51 = scmp.ne.s32.totalorder %s37, %s38
    %p52 = scmp.eq.s32.totalorder %s16, 3
    %p53 = por %p51, %p52
    %p55 = scmp.ne.s32.totalorder %s38, %s54
    %p56 = scmp.eq.s32.totalorder %s16, 0
    %p57 = por %p55, %p56
    %s58 = ssub.s32 %s18, %s25
    %p59 = scmp.eq.s32.totalorder %s58, 0
    %s61 = sadd.s32 %s60, 1
    %s62 = scalar_select %p59, %s60, %s61
    %p65 = pneg %p59
    %p66 = scmp.eq.s32.totalorder %s10, 3
    %p67 = por %p65, %p66
    %p68 = scmp.ne.s32.totalorder %s60, %s63
    %p69 = scmp.eq.s32.totalorder %s10, 0
    %p70 = por %p68, %p69
    %p71 = scmp.ne.s32.totalorder %s60, %s63
    %p72 = scmp.eq.s32.totalorder %s15, 3
    %p73 = por %p71, %p72
    %p74 = scmp.ne.s32.totalorder %s63, %s64
    %p75 = scmp.eq.s32.totalorder %s15, 0
    %p76 = por %p74, %p75
    %p77 = scmp.ne.s32.totalorder %s63, %s64
    %p78 = scmp.eq.s32.totalorder %s16, 3
    %p79 = por %p77, %p78
    %p81 = scmp.ne.s32.totalorder %s64, %s80
    %p82 = scmp.eq.s32.totalorder %s16, 0
    %p83 = por %p81, %p82
    %s85 = sadd.s32 %s84, 1
    %p88 = scmp.eq.s32.totalorder %s10, 3
    %p89 = scmp.ne.s32.totalorder %s84, %s86
    %p90 = scmp.eq.s32.totalorder %s10, 0
    %p91 = por %p89, %p90
    %p92 = scmp.ne.s32.totalorder %s84, %s86
    %p93 = scmp.eq.s32.totalorder %s15, 3
    %p94 = por %p92, %p93
    %p95 = scmp.ne.s32.totalorder %s86, %s87
    %p96 = scmp.eq.s32.totalorder %s15, 0
    %p97 = por %p95, %p96
    %p98 = scmp.ne.s32.totalorder %s86, %s87
    %p99 = scmp.eq.s32.totalorder %s16, 3
    %p100 = por %p98, %p99
    %p102 = scmp.ne.s32.totalorder %s87, %s101
    %p103 = scmp.eq.s32.totalorder %s16, 0
    %p104 = por %p102, %p103
    %s106 = sadd.s32 %s105, 1
    %p109 = scmp.eq.s32.totalorder %s10, 3
    %p110 = scmp.ne.s32.totalorder %s105, %s107
    %p111 = scmp.eq.s32.totalorder %s10, 0
    %p112 = por %p110, %p111
    %p113 = scmp.ne.s32.totalorder %s105, %s107
    %p114 = scmp.eq.s32.totalorder %s15, 3
    %p115 = por %p113, %p114
    %p116 = scmp.ne.s32.totalorder %s107, %s108
    %p117 = scmp.eq.s32.totalorder %s15, 0
    %p118 = por %p116, %p117
    %p119 = scmp.ne.s32.totalorder %s107, %s108
    %p120 = scmp.eq.s32.totalorder %s16, 3
    %p121 = por %p119, %p120
    %p123 = scmp.ne.s32.totalorder %s108, %s122
    %p124 = scmp.eq.s32.totalorder %s16, 0
    %p125 = por %p123, %p124
    %s126 = ssub.s32 %s17, %s29
    %p127 = scmp.eq.s32.totalorder %s126, 0
    %s129 = sadd.s32 %s128, 1
    %s130 = scalar_select %p127, %s128, %s129
    %p133 = pneg %p127
    %p134 = scmp.eq.s32.totalorder %s10, 3
    %p135 = por %p133, %p134
    %p136 = scmp.ne.s32.totalorder %s128, %s131
    %p137 = scmp.eq.s32.totalorder %s10, 0
    %p138 = por %p136, %p137
    %p139 = scmp.ne.s32.totalorder %s128, %s131
    %p140 = scmp.eq.s32.totalorder %s15, 3
    %p141 = por %p139, %p140
    %p142 = scmp.ne.s32.totalorder %s131, %s132
    %p143 = scmp.eq.s32.totalorder %s15, 0
    %p144 = por %p142, %p143
    %p145 = scmp.ne.s32.totalorder %s131, %s132
    %p146 = scmp.eq.s32.totalorder %s16, 3
    %p147 = por %p145, %p146
    %p149 = scmp.ne.s32.totalorder %s132, %s148
    %p150 = scmp.eq.s32.totalorder %s16, 0
    %p151 = por %p149, %p150
    %p152 = scmp.le.s32.totalorder 1, %s10
    %p153 = scmp.lt.s32.totalorder %s10, 5
    %p154 = pnand %p152, %p153
    %p155 = pneg %p154
    // Predicated region
    $region9: #{conv_block_forward_nhwc.3} parent=5 // pred_check
      _
    $region10: #{conv_block_forward_nhwc.3} parent=5 // pred_check_branch
      %157 = sbr.rel (%p154) target = $region12
    $region11: #{conv_block_forward_nhwc.3} parent=5 // pred_region
      %s158 = ssub.s32 %s10, 1
      // Predicated region
      $region13: #{conv_block_forward_nhwc.3} parent=11 // pred_check
        %p159 = pneg %p76
      $region14: #{conv_block_forward_nhwc.3} parent=11 // pred_check_branch
        %161 = sbr.rel (%p159) target = $region16
      $region15: #{conv_block_forward_nhwc.3} parent=11 // pred_region
        %s162 = smul.u32 16, %s20
        %p163 = scmp.lt.s32.totalorder %s162, 15
        %s164 = scalar_select %p163, %s162, 15
        %s165 = smul.addr %s164, 4
        %s166 = scalar_lea.vmem %s1, %s165
        %s167 = smul.u32 16, %s20
      $region16: #{conv_block_forward_nhwc.3} parent=11 // pred_fallthru
        _
      // Predicated region
      $region17: #{conv_block_forward_nhwc.3} parent=11 // pred_check
        %p168 = pneg %p97
      $region18: #{conv_block_forward_nhwc.3} parent=11 // pred_check_branch
        %170 = sbr.rel (%p168) target = $region20
      $region19: #{conv_block_forward_nhwc.3} parent=11 // pred_region
        _
      $region20: #{conv_block_forward_nhwc.3} parent=11 // pred_fallthru
        _
      // Predicated region
      $region21: #{conv_block_forward_nhwc.3} parent=11 // pred_check
        %p171 = pneg %p118
      $region22: #{conv_block_forward_nhwc.3} parent=11 // pred_check_branch
        %173 = sbr.rel (%p171) target = $region24
      $region23: #{conv_block_forward_nhwc.3} parent=11 // pred_region
        _
      $region24: #{conv_block_forward_nhwc.3} parent=11 // pred_fallthru
        _
    $region12: #{conv_block_forward_nhwc.3} parent=5 // pred_fallthru
      _
    %p174 = scmp.lt.s32.totalorder %s10, 4
    // Predicated region
    $region25: #{conv_block_forward_nhwc.3} parent=5 // pred_check
      %p175 = pneg %p174
    $region26: #{conv_block_forward_nhwc.3} parent=5 // pred_check_branch
      %177 = sbr.rel (%p175) target = $region28
    $region27: #{conv_block_forward_nhwc.3} parent=5 // pred_region
      // Predicated region
      $region29: #{conv_block_forward_nhwc.3} parent=27 // pred_check
        %p178 = pneg %p44
      $region30: #{conv_block_forward_nhwc.3} parent=27 // pred_check_branch
        %180 = sbr.rel (%p178) target = $region32
      $region31: #{conv_block_forward_nhwc.3} parent=27 // pred_region
        %s181 = smul.u32 16, %s17
        %p182 = scmp.lt.s32.totalorder %s181, 63
        %s183 = scalar_select %p182, %s181, 63
        %p184 = scmp.lt.s32.totalorder %s18, 0
        %s185 = scalar_select %p184, %s18, 0
        %s186 = sadd.s32 %s185, %s183
        %s187 = smul.addr %s186, 4
        %s188 = scalar_lea.vmem %s0, %s187
        %s189 = smul.u32 16, %s17
      $region32: #{conv_block_forward_nhwc.3} parent=27 // pred_fallthru
        _
    $region28: #{conv_block_forward_nhwc.3} parent=5 // pred_fallthru
      _
    %p190 = scmp.le.s32.totalorder 1, %s10
    %p191 = scmp.lt.s32.totalorder %s10, 5
    %p192 = pnand %p190, %p191
    %p193 = pneg %p192
    // Predicated region
    $region33: #{conv_block_forward_nhwc.3} parent=5 // pred_check
      _
    $region34: #{conv_block_forward_nhwc.3} parent=5 // pred_check_branch
      %195 = sbr.rel (%p192) target = $region36
    $region35: #{conv_block_forward_nhwc.3} parent=5 // pred_region
      %s196 = ssub.s32 %s10, 1
      %s197 = smul.u32 16, %s19
      %p198 = scmp.lt.s32.totalorder %s197, 63
      %s199 = scalar_select %p198, %s197, 63
      %p200 = scmp.lt.s32.totalorder %s20, 0
      %s201 = scalar_select %p200, %s20, 0
      %s202 = sadd.s32 %s201, %s199
      %s203 = smul.addr %s202, 4
      %s204 = scalar_lea.vmem %s0, %s203
      %p205 = pneg %p50
      %p206 = pneg %p47
      %s207 = smul.u32 16, %s20
      %p208 = scmp.lt.s32.totalorder %s207, 15
      %s209 = scalar_select %p208, %s207, 15
      %s210 = smul.addr %s209, 4
      %s211 = scalar_lea.vmem %s1, %s210
      %p212 = pneg %p76
      %p213 = pneg %p73
      %p214 = pneg %p97
      %p215 = pneg %p94
      %p216 = pneg %p118
      %p217 = pneg %p115
      %p218 = pneg %p144
      %p219 = pneg %p141
      %s220 = smul.u32 16, %s19
      %p221 = scmp.lt.s32.totalorder %s220, 63
      %s222 = scalar_select %p221, %s220, 63
      %s223 = smul.addr %s222, 8
      %s224 = scalar_lea.vmem %s4, %s223
      %s225 = smul.u32 16, %s19
      %p226 = scmp.lt.s32.totalorder %s225, 63
      %s227 = scalar_select %p226, %s225, 63
      %p228 = scmp.lt.s32.totalorder %s20, 0
      %s229 = scalar_select %p228, %s20, 0
      %s230 = sadd.s32 %s229, %s227
      %s231 = smul.addr %s230, 4
      %s232 = scalar_lea.vmem %s0, %s231
      %s233 = smul.u32 16, %s19
      %s234 = smul.u32 16, %s20
      %p235 = scmp.lt.s32.totalorder %s234, 15
      %s236 = scalar_select %p235, %s234, 15
      %s237 = smul.addr %s236, 4
      %s238 = scalar_lea.vmem %s1, %s237
      %s239 = smul.u32 16, %s20
      %s240 = smul.u32 16, %s19
      %p241 = scmp.lt.s32.totalorder %s240, 63
      %s242 = scalar_select %p241, %s240, 63
      %s243 = smul.addr %s242, 8
      %s244 = scalar_lea.vmem %s4, %s243
      %s245 = smul.u32 16, %s19
      %p246 = scmp.eq.s32.totalorder %s20, 0
      // Predicated region
      $region37: #{conv_block_forward_nhwc.3} parent=35 // pred_check
        %p247 = pneg %p246
      $region38: #{conv_block_forward_nhwc.3} parent=35 // pred_check_branch
        %249 = sbr.rel (%p247) target = $region40
      $region39: #{conv_block_forward_nhwc.3} parent=35 // pred_region
        %250 = vst [vmem:[#allocation2] sm:$0xff] 0.0
        %251 = vst [vmem:[#allocation2 + $0x8] sm:$0xff] 0.0
        %252 = vst [vmem:[#allocation2 + $0x10] sm:$0xff] 0.0
        %253 = vst [vmem:[#allocation2 + $0x18] sm:$0xff] 0.0
        %254 = vst [vmem:[#allocation2 + $0x20] sm:$0xff] 0.0
        %255 = vst [vmem:[#allocation2 + $0x28] sm:$0xff] 0.0
        %256 = vst [vmem:[#allocation2 + $0x30] sm:$0xff] 0.0
        %257 = vst [vmem:[#allocation2 + $0x38] sm:$0xff] 0.0
        %258 = vst [vmem:[#allocation2 + $0x40] sm:$0xff] 0.0
        %259 = vst [vmem:[#allocation2 + $0x48] sm:$0xff] 0.0
        %260 = vst [vmem:[#allocation2 + $0x50] sm:$0xff] 0.0
        %261 = vst [vmem:[#allocation2 + $0x58] sm:$0xff] 0.0
        %262 = vst [vmem:[#allocation2 + $0x60] sm:$0xff] 0.0
        %263 = vst [vmem:[#allocation2 + $0x68] sm:$0xff] 0.0
        %264 = vst [vmem:[#allocation2 + $0x70] sm:$0xff] 0.0
        %265 = vst [vmem:[#allocation2 + $0x78] sm:$0xff] 0.0
      $region40: #{conv_block_forward_nhwc.3} parent=35 // pred_fallthru
        _
      %v266 = vld [vmem:[#allocation2] sm:$0xff]
      %v267 = vld [vmem:[#allocation2 + $0x8] sm:$0xff]
      %v268 = vld [vmem:[#allocation2 + $0x10] sm:$0xff]
      %v269 = vld [vmem:[#allocation2 + $0x18] sm:$0xff]
      %v270 = vld [vmem:[#allocation2 + $0x20] sm:$0xff]
      %v271 = vld [vmem:[#allocation2 + $0x28] sm:$0xff]
      %v272 = vld [vmem:[#allocation2 + $0x30] sm:$0xff]
      %v273 = vld [vmem:[#allocation2 + $0x38] sm:$0xff]
      %v274 = vld [vmem:[#allocation2 + $0x40] sm:$0xff]
      %v275 = vld [vmem:[#allocation2 + $0x48] sm:$0xff]
      %v276 = vld [vmem:[#allocation2 + $0x50] sm:$0xff]
      %v277 = vld [vmem:[#allocation2 + $0x58] sm:$0xff]
      %v278 = vld [vmem:[#allocation2 + $0x60] sm:$0xff]
      %v279 = vld [vmem:[#allocation2 + $0x68] sm:$0xff]
      %v280 = vld [vmem:[#allocation2 + $0x70] sm:$0xff]
      %v281 = vld [vmem:[#allocation2 + $0x78] sm:$0xff]
      %v282 = vld [vmem:[%s232] sm:$0xf]
      %v283 = vld [vmem:[%s232 + $0x4] sm:$0xf]
      %v284 = vld [vmem:[%s232 + $0x8] sm:$0xf]
      %v285 = vld [vmem:[%s232 + $0xc] sm:$0xf]
      %v286 = vld [vmem:[%s232 + $0x10] sm:$0xf]
      %v287 = vld [vmem:[%s232 + $0x14] sm:$0xf]
      %v288 = vld [vmem:[%s232 + $0x18] sm:$0xf]
      %v289 = vld [vmem:[%s232 + $0x1c] sm:$0xf]
      %v290 = vld [vmem:[%s232 + $0x20] sm:$0xf]
      %v291 = vld [vmem:[%s232 + $0x24] sm:$0xf]
      %v292 = vld [vmem:[%s232 + $0x28] sm:$0xf]
      %v293 = vld [vmem:[%s232 + $0x2c] sm:$0xf]
      %v294 = vld [vmem:[%s232 + $0x30] sm:$0xf]
      %v295 = vld [vmem:[%s232 + $0x34] sm:$0xf]
      %v296 = vld [vmem:[%s232 + $0x38] sm:$0xf]
      %v297 = vld [vmem:[%s232 + $0x3c] sm:$0xf]
      %v298 = vld [vmem:[%s238] sm:$0xf]
      %v299 = vld [vmem:[%s238 + $0x4] sm:$0xf]
      %v300 = vld [vmem:[%s238 + $0x8] sm:$0xf]
      %v301 = vld [vmem:[%s238 + $0xc] sm:$0xf]
      %v302 = vld [vmem:[%s238 + $0x10] sm:$0xf]
      %v303 = vld [vmem:[%s238 + $0x14] sm:$0xf]
      %v304 = vld [vmem:[%s238 + $0x18] sm:$0xf]
      %v305 = vld [vmem:[%s238 + $0x1c] sm:$0xf]
      %v306 = vld [vmem:[%s238 + $0x20] sm:$0xf]
      %v307 = vld [vmem:[%s238 + $0x24] sm:$0xf]
      %v308 = vld [vmem:[%s238 + $0x28] sm:$0xf]
      %v309 = vld [vmem:[%s238 + $0x2c] sm:$0xf]
      %v310 = vld [vmem:[%s238 + $0x30] sm:$0xf]
      %v311 = vld [vmem:[%s238 + $0x34] sm:$0xf]
      %v312 = vld [vmem:[%s238 + $0x38] sm:$0xf]
      %v313 = vld [vmem:[%s238 + $0x3c] sm:$0xf]
      %v330 = vunpack.c.l.b16 %v282
      %v331 = vunpack.c.l.b16 %v283
      %v332 = vunpack.c.l.b16 %v284
      %v333 = vunpack.c.l.b16 %v285
      %v334 = vunpack.c.l.b16 %v286
      %v335 = vunpack.c.l.b16 %v287
      %v336 = vunpack.c.l.b16 %v288
      %v337 = vunpack.c.l.b16 %v289
      %v338 = vunpack.c.l.b16 %v290
      %v339 = vunpack.c.l.b16 %v291
      %v340 = vunpack.c.l.b16 %v292
      %v341 = vunpack.c.l.b16 %v293
      %v342 = vunpack.c.l.b16 %v294
      %v343 = vunpack.c.l.b16 %v295
      %v344 = vunpack.c.l.b16 %v296
      %v345 = vunpack.c.l.b16 %v297
      %v346 = vpack.c.b16 %v331, %v330
      %v347 = vpack.c.b16 %v333, %v332
      %v348 = vpack.c.b16 %v335, %v334
      %v349 = vpack.c.b16 %v337, %v336
      %v350 = vpack.c.b16 %v339, %v338
      %v351 = vpack.c.b16 %v341, %v340
      %v352 = vpack.c.b16 %v343, %v342
      %v353 = vpack.c.b16 %v345, %v344
      %v378 = vunpack.c.l.b16 %v298
      %v379 = vunpack.c.l.b16 %v299
      %v380 = vunpack.c.l.b16 %v300
      %v381 = vunpack.c.l.b16 %v301
      %v382 = vunpack.c.l.b16 %v302
      %v383 = vunpack.c.l.b16 %v303
      %v384 = vunpack.c.l.b16 %v304
      %v385 = vunpack.c.l.b16 %v305
      %v386 = vunpack.c.l.b16 %v306
      %v387 = vunpack.c.l.b16 %v307
      %v388 = vunpack.c.l.b16 %v308
      %v389 = vunpack.c.l.b16 %v309
      %v390 = vunpack.c.l.b16 %v310
      %v391 = vunpack.c.l.b16 %v311
      %v392 = vunpack.c.l.b16 %v312
      %v393 = vunpack.c.l.b16 %v313
      %v394 = vpack.c.b16 %v379, %v378
      %v395 = vpack.c.b16 %v381, %v380
      %v396 = vpack.c.b16 %v383, %v382
      %v397 = vpack.c.b16 %v385, %v384
      %v398 = vpack.c.b16 %v387, %v386
      %v399 = vpack.c.b16 %v389, %v388
      %v400 = vpack.c.b16 %v391, %v390
      %v401 = vpack.c.b16 %v393, %v392
      %410 = vmatpush.bf16.msra.mxu0 %v401
      %411 = vmatpush.bf16.msra.mxu0 %v400
      %412 = vmatpush.bf16.msra.mxu0 %v399
      %413 = vmatpush.bf16.msra.mxu0 %v398
      %414 = vmatpush.bf16.msra.mxu0 %v397
      %415 = vmatpush.bf16.msra.mxu0 %v396
      %416 = vmatpush.bf16.msra.mxu0 %v395
      %417 = vmatpush.bf16.msra.mxu0 %v394
      %418 = vmatmul.bf16.gmra.mxu0 %v346
      %v419 = vpop.f32.mrf.mxu0
      %v420 = vadd.f32 0.0, %v419
      %v421 = vpop.f32.mrf.mxu0
      %v422 = vadd.f32 0.0, %v421
      %423 = vmatmul.bf16.gmra.mxu0 %v347
      %v424 = vpop.f32.mrf.mxu0
      %v425 = vadd.f32 0.0, %v424
      %v426 = vpop.f32.mrf.mxu0
      %v427 = vadd.f32 0.0, %v426
      %428 = vmatmul.bf16.gmra.mxu0 %v348
      %v429 = vpop.f32.mrf.mxu0
      %v430 = vadd.f32 0.0, %v429
      %v431 = vpop.f32.mrf.mxu0
      %v432 = vadd.f32 0.0, %v431
      %433 = vmatmul.bf16.gmra.mxu0 %v349
      %v434 = vpop.f32.mrf.mxu0
      %v435 = vadd.f32 0.0, %v434
      %v436 = vpop.f32.mrf.mxu0
      %v437 = vadd.f32 0.0, %v436
      %438 = vmatmul.bf16.gmra.mxu0 %v350
      %v439 = vpop.f32.mrf.mxu0
      %v440 = vadd.f32 0.0, %v439
      %v441 = vpop.f32.mrf.mxu0
      %v442 = vadd.f32 0.0, %v441
      %443 = vmatmul.bf16.gmra.mxu0 %v351
      %v444 = vpop.f32.mrf.mxu0
      %v445 = vadd.f32 0.0, %v444
      %v446 = vpop.f32.mrf.mxu0
      %v447 = vadd.f32 0.0, %v446
      %448 = vmatmul.bf16.gmra.mxu0 %v352
      %v449 = vpop.f32.mrf.mxu0
      %v450 = vadd.f32 0.0, %v449
      %v451 = vpop.f32.mrf.mxu0
      %v452 = vadd.f32 0.0, %v451
      %453 = vmatmul.bf16.gmra.mxu0 %v353
      %v454 = vpop.f32.mrf.mxu0
      %v455 = vadd.f32 0.0, %v454
      %v456 = vpop.f32.mrf.mxu0
      %v457 = vadd.f32 0.0, %v456
      %458 = vdwg.mxu0
      %v459 = vadd.f32 %v266, %v420
      %v460 = vadd.f32 %v267, %v422
      %v461 = vadd.f32 %v268, %v425
      %v462 = vadd.f32 %v269, %v427
      %v463 = vadd.f32 %v270, %v430
      %v464 = vadd.f32 %v271, %v432
      %v465 = vadd.f32 %v272, %v435
      %v466 = vadd.f32 %v273, %v437
      %v467 = vadd.f32 %v274, %v440
      %v468 = vadd.f32 %v275, %v442
      %v469 = vadd.f32 %v276, %v445
      %v470 = vadd.f32 %v277, %v447
      %v471 = vadd.f32 %v278, %v450
      %v472 = vadd.f32 %v279, %v452
      %v473 = vadd.f32 %v280, %v455
      %v474 = vadd.f32 %v281, %v457
      %475 = vst [vmem:[#allocation2] sm:$0xff] %v459
      %476 = vst [vmem:[#allocation2 + $0x8] sm:$0xff] %v460
      %477 = vst [vmem:[#allocation2 + $0x10] sm:$0xff] %v461
      %478 = vst [vmem:[#allocation2 + $0x18] sm:$0xff] %v462
      %479 = vst [vmem:[#allocation2 + $0x20] sm:$0xff] %v463
      %480 = vst [vmem:[#allocation2 + $0x28] sm:$0xff] %v464
      %481 = vst [vmem:[#allocation2 + $0x30] sm:$0xff] %v465
      %482 = vst [vmem:[#allocation2 + $0x38] sm:$0xff] %v466
      %483 = vst [vmem:[#allocation2 + $0x40] sm:$0xff] %v467
      %484 = vst [vmem:[#allocation2 + $0x48] sm:$0xff] %v468
      %485 = vst [vmem:[#allocation2 + $0x50] sm:$0xff] %v469
      %486 = vst [vmem:[#allocation2 + $0x58] sm:$0xff] %v470
      %487 = vst [vmem:[#allocation2 + $0x60] sm:$0xff] %v471
      %488 = vst [vmem:[#allocation2 + $0x68] sm:$0xff] %v472
      %489 = vst [vmem:[#allocation2 + $0x70] sm:$0xff] %v473
      %490 = vst [vmem:[#allocation2 + $0x78] sm:$0xff] %v474
      // Predicated region
      $region41: #{conv_block_forward_nhwc.3} parent=35 // pred_check
        %p491 = pneg %p246
      $region42: #{conv_block_forward_nhwc.3} parent=35 // pred_check_branch
        %493 = sbr.rel (%p491) target = $region44
      $region43: #{conv_block_forward_nhwc.3} parent=35 // pred_region
        %v494 = vld [vmem:[#allocation2] sm:$0xff]
        %v495 = vld [vmem:[#allocation2 + $0x8] sm:$0xff]
        %v496 = vld [vmem:[#allocation2 + $0x10] sm:$0xff]
        %v497 = vld [vmem:[#allocation2 + $0x18] sm:$0xff]
        %v498 = vld [vmem:[#allocation2 + $0x20] sm:$0xff]
        %v499 = vld [vmem:[#allocation2 + $0x28] sm:$0xff]
        %v500 = vld [vmem:[#allocation2 + $0x30] sm:$0xff]
        %v501 = vld [vmem:[#allocation2 + $0x38] sm:$0xff]
        %v502 = vld [vmem:[#allocation2 + $0x40] sm:$0xff]
        %v503 = vld [vmem:[#allocation2 + $0x48] sm:$0xff]
        %v504 = vld [vmem:[#allocation2 + $0x50] sm:$0xff]
        %v505 = vld [vmem:[#allocation2 + $0x58] sm:$0xff]
        %v506 = vld [vmem:[#allocation2 + $0x60] sm:$0xff]
        %v507 = vld [vmem:[#allocation2 + $0x68] sm:$0xff]
        %v508 = vld [vmem:[#allocation2 + $0x70] sm:$0xff]
        %v509 = vld [vmem:[#allocation2 + $0x78] sm:$0xff]
        %v510 = vld [vmem:[%s2] sm:$0x1]
        %v512 = vperm.slane %v510, 0
        %v514 = vmul.f32 %v494, %v512
        %v515 = vmul.f32 %v495, %v512
        %v516 = vmul.f32 %v496, %v512
        %v517 = vmul.f32 %v497, %v512
        %v518 = vmul.f32 %v498, %v512
        %v519 = vmul.f32 %v499, %v512
        %v520 = vmul.f32 %v500, %v512
        %v521 = vmul.f32 %v501, %v512
        %v522 = vmul.f32 %v502, %v512
        %v523 = vmul.f32 %v503, %v512
        %v524 = vmul.f32 %v504, %v512
        %v525 = vmul.f32 %v505, %v512
        %v526 = vmul.f32 %v506, %v512
        %v527 = vmul.f32 %v507, %v512
        %v528 = vmul.f32 %v508, %v512
        %v529 = vmul.f32 %v509, %v512
        %v530 = vld [vmem:[%s3] sm:$0x1]
        %v532 = vperm.slane %v530, 0
        %v534 = vadd.f32 %v514, %v532
        %v535 = vadd.f32 %v515, %v532
        %v536 = vadd.f32 %v516, %v532
        %v537 = vadd.f32 %v517, %v532
        %v538 = vadd.f32 %v518, %v532
        %v539 = vadd.f32 %v519, %v532
        %v540 = vadd.f32 %v520, %v532
        %v541 = vadd.f32 %v521, %v532
        %v542 = vadd.f32 %v522, %v532
        %v543 = vadd.f32 %v523, %v532
        %v544 = vadd.f32 %v524, %v532
        %v545 = vadd.f32 %v525, %v532
        %v546 = vadd.f32 %v526, %v532
        %v547 = vadd.f32 %v527, %v532
        %v548 = vadd.f32 %v528, %v532
        %v549 = vadd.f32 %v529, %v532
        %v550 = vsub.f32 0.0, %v534
        %v551 = vsub.f32 0.0, %v535
        %v552 = vsub.f32 0.0, %v536
        %v553 = vsub.f32 0.0, %v537
        %v554 = vsub.f32 0.0, %v538
        %v555 = vsub.f32 0.0, %v539
        %v556 = vsub.f32 0.0, %v540
        %v557 = vsub.f32 0.0, %v541
        %v558 = vsub.f32 0.0, %v542
        %v559 = vsub.f32 0.0, %v543
        %v560 = vsub.f32 0.0, %v544
        %v561 = vsub.f32 0.0, %v545
        %v562 = vsub.f32 0.0, %v546
        %v563 = vsub.f32 0.0, %v547
        %v564 = vsub.f32 0.0, %v548
        %v565 = vsub.f32 0.0, %v549
        %v566 = vmul.f32 %v550, 1.442695
        %v567 = vpow.pop %v566
        %v568 = vmul.f32 %v551, 1.442695
        %v569 = vpow.pop %v568
        %v570 = vmul.f32 %v552, 1.442695
        %v571 = vpow.pop %v570
        %v572 = vmul.f32 %v553, 1.442695
        %v573 = vpow.pop %v572
        %v574 = vmul.f32 %v554, 1.442695
        %v575 = vpow.pop %v574
        %v576 = vmul.f32 %v555, 1.442695
        %v577 = vpow.pop %v576
        %v578 = vmul.f32 %v556, 1.442695
        %v579 = vpow.pop %v578
        %v580 = vmul.f32 %v557, 1.442695
        %v581 = vpow.pop %v580
        %v582 = vmul.f32 %v558, 1.442695
        %v583 = vpow.pop %v582
        %v584 = vmul.f32 %v559, 1.442695
        %v585 = vpow.pop %v584
        %v586 = vmul.f32 %v560, 1.442695
        %v587 = vpow.pop %v586
        %v588 = vmul.f32 %v561, 1.442695
        %v589 = vpow.pop %v588
        %v590 = vmul.f32 %v562, 1.442695
        %v591 = vpow.pop %v590
        %v592 = vmul.f32 %v563, 1.442695
        %v593 = vpow.pop %v592
        %v594 = vmul.f32 %v564, 1.442695
        %v595 = vpow.pop %v594
        %v596 = vmul.f32 %v565, 1.442695
        %v597 = vpow.pop %v596
        %v598 = vadd.f32 %v567, 1.0
        %v599 = vadd.f32 %v569, 1.0
        %v600 = vadd.f32 %v571, 1.0
        %v601 = vadd.f32 %v573, 1.0
        %v602 = vadd.f32 %v575, 1.0
        %v603 = vadd.f32 %v577, 1.0
        %v604 = vadd.f32 %v579, 1.0
        %v605 = vadd.f32 %v581, 1.0
        %v606 = vadd.f32 %v583, 1.0
        %v607 = vadd.f32 %v585, 1.0
        %v608 = vadd.f32 %v587, 1.0
        %v609 = vadd.f32 %v589, 1.0
        %v610 = vadd.f32 %v591, 1.0
        %v611 = vadd.f32 %v593, 1.0
        %v612 = vadd.f32 %v595, 1.0
        %v613 = vadd.f32 %v597, 1.0
        %v614 = vrcp.pop %v598
        %v615 = vrcp.pop %v599
        %v616 = vrcp.pop %v600
        %v617 = vrcp.pop %v601
        %v618 = vrcp.pop %v602
        %v619 = vrcp.pop %v603
        %v620 = vrcp.pop %v604
        %v621 = vrcp.pop %v605
        %v622 = vrcp.pop %v606
        %v623 = vrcp.pop %v607
        %v624 = vrcp.pop %v608
        %v625 = vrcp.pop %v609
        %v626 = vrcp.pop %v610
        %v627 = vrcp.pop %v611
        %v628 = vrcp.pop %v612
        %v629 = vrcp.pop %v613
        %v630 = vmul.f32 %v534, %v614
        %v631 = vmul.f32 %v535, %v615
        %v632 = vmul.f32 %v536, %v616
        %v633 = vmul.f32 %v537, %v617
        %v634 = vmul.f32 %v538, %v618
        %v635 = vmul.f32 %v539, %v619
        %v636 = vmul.f32 %v540, %v620
        %v637 = vmul.f32 %v541, %v621
        %v638 = vmul.f32 %v542, %v622
        %v639 = vmul.f32 %v543, %v623
        %v640 = vmul.f32 %v544, %v624
        %v641 = vmul.f32 %v545, %v625
        %v642 = vmul.f32 %v546, %v626
        %v643 = vmul.f32 %v547, %v627
        %v644 = vmul.f32 %v548, %v628
        %v645 = vmul.f32 %v549, %v629
        %646 = vst [vmem:[%s244] sm:$0xff] %v630
        %647 = vst [vmem:[%s244 + $0x8] sm:$0xff] %v631
        %648 = vst [vmem:[%s244 + $0x10] sm:$0xff] %v632
        %649 = vst [vmem:[%s244 + $0x18] sm:$0xff] %v633
        %650 = vst [vmem:[%s244 + $0x20] sm:$0xff] %v634
        %651 = vst [vmem:[%s244 + $0x28] sm:$0xff] %v635
        %652 = vst [vmem:[%s244 + $0x30] sm:$0xff] %v636
        %653 = vst [vmem:[%s244 + $0x38] sm:$0xff] %v637
        %654 = vst [vmem:[%s244 + $0x40] sm:$0xff] %v638
        %655 = vst [vmem:[%s244 + $0x48] sm:$0xff] %v639
        %656 = vst [vmem:[%s244 + $0x50] sm:$0xff] %v640
        %657 = vst [vmem:[%s244 + $0x58] sm:$0xff] %v641
        %658 = vst [vmem:[%s244 + $0x60] sm:$0xff] %v642
        %659 = vst [vmem:[%s244 + $0x68] sm:$0xff] %v643
        %660 = vst [vmem:[%s244 + $0x70] sm:$0xff] %v644
        %661 = vst [vmem:[%s244 + $0x78] sm:$0xff] %v645
      $region44: #{conv_block_forward_nhwc.3} parent=35 // pred_fallthru
        _
      %s662 = smul.u32 16, %s19
      %p663 = scmp.lt.s32.totalorder %s662, 63
      %s664 = scalar_select %p663, %s662, 63
      %s665 = smul.addr %s664, 8
      %s666 = scalar_lea.vmem %s4, %s665
      // Predicated region
      $region45: #{conv_block_forward_nhwc.3} parent=35 // pred_check
        %p667 = pneg %p141
      $region46: #{conv_block_forward_nhwc.3} parent=35 // pred_check_branch
        %669 = sbr.rel (%p667) target = $region48
      $region47: #{conv_block_forward_nhwc.3} parent=35 // pred_region
        %s670 = smul.u32 16, %s19
      $region48: #{conv_block_forward_nhwc.3} parent=35 // pred_fallthru
        _
    $region36: #{conv_block_forward_nhwc.3} parent=5 // pred_fallthru
      _
    %p671 = scmp.le.s32.totalorder 2, %s10
    // Predicated region
    $region49: #{conv_block_forward_nhwc.3} parent=5 // pred_check
      %p672 = pneg %p671
    $region50: #{conv_block_forward_nhwc.3} parent=5 // pred_check_branch
      %674 = sbr.rel (%p672) target = $region52
    $region51: #{conv_block_forward_nhwc.3} parent=5 // pred_region
      %s675 = ssub.s32 %s10, 2
      // Predicated region
      $region53: #{conv_block_forward_nhwc.3} parent=51 // pred_check
        %p676 = pneg %p147
      $region54: #{conv_block_forward_nhwc.3} parent=51 // pred_check_branch
        %678 = sbr.rel (%p676) target = $region56
      $region55: #{conv_block_forward_nhwc.3} parent=51 // pred_region
        %s679 = smul.u32 16, %s21
        %p680 = scmp.lt.s32.totalorder %s679, 63
        %s681 = scalar_select %p680, %s679, 63
        %s682 = smul.addr %s681, 8
        %s683 = scalar_lea.vmem %s4, %s682
      $region56: #{conv_block_forward_nhwc.3} parent=51 // pred_fallthru
        _
    $region52: #{conv_block_forward_nhwc.3} parent=5 // pred_fallthru
      _
  $region6: #{conv_block_forward_nhwc.3} parent=0 // loop_footer
    %s14 = sadd.s32 1, %s10
  $region7: #{conv_block_forward_nhwc.3} parent=0 // loop_footer_branch
    %9 = sbr.rel target = $region3
  $region8: #{conv_block_forward_nhwc.3} parent=0 // loop_exit
    _

// kernel: conv_block_forward_nhwc.2
$region0: #{conv_block_forward_nhwc.2}
  #allocation0 [shape = 'u32[]', space=smem, size = 0x4, offset = 0x4, fixed_abs, tag = 'smem constant byte address 0x4 - core index']
  #allocation1 [shape = 'u32[72,128]{1,0:T(1,128)}', space=vmem, size = 0x9000, scoped, tag = 'internal scratch']
  #allocation2 [shape = 'f32[128,128]{1,0:T(8,128)}', space=vmem, size = 0x10000, scoped, tag = 'scratch operand']
  %s0 = inlined_call_operand.vmem [shape: bf16[512,128], index: 0, kind: input, shape index: {}]
  %s1 = inlined_call_operand.vmem [shape: bf16[128,128], index: 1, kind: input, shape index: {}]
  %s2 = inlined_call_operand.vmem [shape: f32[4,1,128], index: 2, kind: output, shape index: {0}]
  %s3 = inlined_call_operand.vmem [shape: f32[4,1,128], index: 3, kind: output, shape index: {1}]
  %4 = xla_tuple %s2, %s3
  %s5 = sld [smem:[#allocation0]]
  $region57: #{conv_block_forward_nhwc.2} parent=0
    _
  %s7 = ssub.s32 1, %s5
  %s8 = scalar_select 0, %s7, %s5
  loop: start=0, step=1, limit=6
  $region2: #{conv_block_forward_nhwc.2} parent=0 // loop_pre_header
    _
  $region3: #{conv_block_forward_nhwc.2} parent=0 // loop_header
    %s10 = sphi 0, %s14
    %p11 = scmp.ge.s32.totalorder %s10, 6
    %s17 = sphi 0, %s29
    %s18 = sphi 0, %s25
    %s19 = sphi 0, %s17
    %s20 = sphi 0, %s18
    %s21 = sphi 0, %s19
    %s22 = sphi 0, %s20
    %s34 = sphi 0, %s36
    %s37 = sphi 0, %s34
    %s38 = sphi 0, %s37
    %s54 = sphi 0, %s38
    %s60 = sphi 0, %s62
    %s63 = sphi 0, %s60
    %s64 = sphi 0, %s63
    %s80 = sphi 0, %s64
    %s86 = sphi 0, %s88
    %s89 = sphi 0, %s86
    %s90 = sphi 0, %s89
    %s106 = sphi 0, %s90
    %s112 = sphi 0, %s114
    %s115 = sphi 0, %s112
    %s116 = sphi 0, %s115
    %s132 = sphi 0, %s116
  $region4: #{conv_block_forward_nhwc.2} parent=0 // loop_header_branch
    %13 = sbr.rel (%p11) target = $region8
  $region5: #{conv_block_forward_nhwc.2} parent=0 // loop_body
    %s15 = ssub.s32 %s10, 1
    %s16 = ssub.s32 %s10, 2
    %s23 = sadd.s32 1, %s18
    %p24 = scmp.ge.s32.totalorder %s23, 1
    %s25 = scalar_select %p24, 0, %s23
    %s26 = sadd.s32 1, %s17
    %s27 = scalar_select %p24, %s26, %s17
    %p28 = scmp.ge.s32.totalorder %s27, 4
    %s29 = scalar_select %p28, 0, %s27
    %s30 = ssub.s32 %s17, %s29
    %s31 = ssub.s32 %s18, %s25
    %s32 = sor.u32 %s30, %s31
    %p33 = scmp.eq.s32.totalorder %s32, 0
    %s35 = sadd.s32 %s34, 1
    %s36 = scalar_select %p33, %s34, %s35
    %p39 = pneg %p33
    %p40 = scmp.eq.s32.totalorder %s10, 3
    %p41 = por %p39, %p40
    %p42 = scmp.ne.s32.totalorder %s34, %s37
    %p43 = scmp.eq.s32.totalorder %s10, 0
    %p44 = por %p42, %p43
    %p45 = scmp.ne.s32.totalorder %s34, %s37
    %p46 = scmp.eq.s32.totalorder %s15, 3
    %p47 = por %p45, %p46
    %p48 = scmp.ne.s32.totalorder %s37, %s38
    %p49 = scmp.eq.s32.totalorder %s15, 0
    %p50 = por %p48, %p49
    %p51 = scmp.ne.s32.totalorder %s37, %s38
    %p52 = scmp.eq.s32.totalorder %s16, 3
    %p53 = por %p51, %p52
    %p55 = scmp.ne.s32.totalorder %s38, %s54
    %p56 = scmp.eq.s32.totalorder %s16, 0
    %p57 = por %p55, %p56
    %s58 = ssub.s32 %s18, %s25
    %p59 = scmp.eq.s32.totalorder %s58, 0
    %s61 = sadd.s32 %s60, 1
    %s62 = scalar_select %p59, %s60, %s61
    %p65 = pneg %p59
    %p66 = scmp.eq.s32.totalorder %s10, 3
    %p67 = por %p65, %p66
    %p68 = scmp.ne.s32.totalorder %s60, %s63
    %p69 = scmp.eq.s32.totalorder %s10, 0
    %p70 = por %p68, %p69
    %p71 = scmp.ne.s32.totalorder %s60, %s63
    %p72 = scmp.eq.s32.totalorder %s15, 3
    %p73 = por %p71, %p72
    %p74 = scmp.ne.s32.totalorder %s63, %s64
    %p75 = scmp.eq.s32.totalorder %s15, 0
    %p76 = por %p74, %p75
    %p77 = scmp.ne.s32.totalorder %s63, %s64
    %p78 = scmp.eq.s32.totalorder %s16, 3
    %p79 = por %p77, %p78
    %p81 = scmp.ne.s32.totalorder %s64, %s80
    %p82 = scmp.eq.s32.totalorder %s16, 0
    %p83 = por %p81, %p82
    %s84 = ssub.s32 %s17, %s29
    %p85 = scmp.eq.s32.totalorder %s84, 0
    %s87 = sadd.s32 %s86, 1
    %s88 = scalar_select %p85, %s86, %s87
    %p91 = pneg %p85
    %p92 = scmp.eq.s32.totalorder %s10, 3
    %p93 = por %p91, %p92
    %p94 = scmp.ne.s32.totalorder %s86, %s89
    %p95 = scmp.eq.s32.totalorder %s10, 0
    %p96 = por %p94, %p95
    %p97 = scmp.ne.s32.totalorder %s86, %s89
    %p98 = scmp.eq.s32.totalorder %s15, 3
    %p99 = por %p97, %p98
    %p100 = scmp.ne.s32.totalorder %s89, %s90
    %p101 = scmp.eq.s32.totalorder %s15, 0
    %p102 = por %p100, %p101
    %p103 = scmp.ne.s32.totalorder %s89, %s90
    %p104 = scmp.eq.s32.totalorder %s16, 3
    %p105 = por %p103, %p104
    %p107 = scmp.ne.s32.totalorder %s90, %s106
    %p108 = scmp.eq.s32.totalorder %s16, 0
    %p109 = por %p107, %p108
    %s110 = ssub.s32 %s17, %s29
    %p111 = scmp.eq.s32.totalorder %s110, 0
    %s113 = sadd.s32 %s112, 1
    %s114 = scalar_select %p111, %s112, %s113
    %p117 = pneg %p111
    %p118 = scmp.eq.s32.totalorder %s10, 3
    %p119 = por %p117, %p118
    %p120 = scmp.ne.s32.totalorder %s112, %s115
    %p121 = scmp.eq.s32.totalorder %s10, 0
    %p122 = por %p120, %p121
    %p123 = scmp.ne.s32.totalorder %s112, %s115
    %p124 = scmp.eq.s32.totalorder %s15, 3
    %p125 = por %p123, %p124
    %p126 = scmp.ne.s32.totalorder %s115, %s116
    %p127 = scmp.eq.s32.totalorder %s15, 0
    %p128 = por %p126, %p127
    %p129 = scmp.ne.s32.totalorder %s115, %s116
    %p130 = scmp.eq.s32.totalorder %s16, 3
    %p131 = por %p129, %p130
    %p133 = scmp.ne.s32.totalorder %s116, %s132
    %p134 = scmp.eq.s32.totalorder %s16, 0
    %p135 = por %p133, %p134
    %p136 = scmp.le.s32.totalorder 1, %s10
    %p137 = scmp.lt.s32.totalorder %s10, 5
    %p138 = pnand %p136, %p137
    %p139 = pneg %p138
    // Predicated region
    $region9: #{conv_block_forward_nhwc.2} parent=5 // pred_check
      _
    $region10: #{conv_block_forward_nhwc.2} parent=5 // pred_check_branch
      %141 = sbr.rel (%p138) target = $region12
    $region11: #{conv_block_forward_nhwc.2} parent=5 // pred_region
      %s142 = ssub.s32 %s10, 1
      // Predicated region
      $region13: #{conv_block_forward_nhwc.2} parent=11 // pred_check
        %p143 = pneg %p76
      $region14: #{conv_block_forward_nhwc.2} parent=11 // pred_check_branch
        %145 = sbr.rel (%p143) target = $region16
      $region15: #{conv_block_forward_nhwc.2} parent=11 // pred_region
        %s146 = smul.u32 16, %s20
        %p147 = scmp.lt.s32.totalorder %s146, 15
        %s148 = scalar_select %p147, %s146, 15
        %s149 = smul.addr %s148, 4
        %s150 = scalar_lea.vmem %s1, %s149
        %s151 = smul.u32 16, %s20
      $region16: #{conv_block_forward_nhwc.2} parent=11 // pred_fallthru
        _
    $region12: #{conv_block_forward_nhwc.2} parent=5 // pred_fallthru
      _
    %p152 = scmp.lt.s32.totalorder %s10, 4
    // Predicated region
    $region17: #{conv_block_forward_nhwc.2} parent=5 // pred_check
      %p153 = pneg %p152
    $region18: #{conv_block_forward_nhwc.2} parent=5 // pred_check_branch
      %155 = sbr.rel (%p153) target = $region20
    $region19: #{conv_block_forward_nhwc.2} parent=5 // pred_region
      // Predicated region
      $region21: #{conv_block_forward_nhwc.2} parent=19 // pred_check
        %p156 = pneg %p44
      $region22: #{conv_block_forward_nhwc.2} parent=19 // pred_check_branch
        %158 = sbr.rel (%p156) target = $region24
      $region23: #{conv_block_forward_nhwc.2} parent=19 // pred_region
        %s159 = smul.u32 16, %s17
        %p160 = scmp.lt.s32.totalorder %s159, 63
        %s161 = scalar_select %p160, %s159, 63
        %p162 = scmp.lt.s32.totalorder %s18, 0
        %s163 = scalar_select %p162, %s18, 0
        %s164 = sadd.s32 %s163, %s161
        %s165 = smul.addr %s164, 4
        %s166 = scalar_lea.vmem %s0, %s165
        %s167 = smul.u32 16, %s17
      $region24: #{conv_block_forward_nhwc.2} parent=19 // pred_fallthru
        _
    $region20: #{conv_block_forward_nhwc.2} parent=5 // pred_fallthru
      _
    %p168 = scmp.le.s32.totalorder 1, %s10
    %p169 = scmp.lt.s32.totalorder %s10, 5
    %p170 = pnand %p168, %p169
    %p171 = pneg %p170
    // Predicated region
    $region25: #{conv_block_forward_nhwc.2} parent=5 // pred_check
      _
    $region26: #{conv_block_forward_nhwc.2} parent=5 // pred_check_branch
      %173 = sbr.rel (%p170) target = $region28
    $region27: #{conv_block_forward_nhwc.2} parent=5 // pred_region
      %s174 = ssub.s32 %s10, 1
      %s175 = smul.u32 16, %s19
      %p176 = scmp.lt.s32.totalorder %s175, 63
      %s177 = scalar_select %p176, %s175, 63
      %p178 = scmp.lt.s32.totalorder %s20, 0
      %s179 = scalar_select %p178, %s20, 0
      %s180 = sadd.s32 %s179, %s177
      %s181 = smul.addr %s180, 4
      %s182 = scalar_lea.vmem %s0, %s181
      %p183 = pneg %p50
      %p184 = pneg %p47
      %s185 = smul.u32 16, %s20
      %p186 = scmp.lt.s32.totalorder %s185, 15
      %s187 = scalar_select %p186, %s185, 15
      %s188 = smul.addr %s187, 4
      %s189 = scalar_lea.vmem %s1, %s188
      %p190 = pneg %p76
      %p191 = pneg %p73
      %p192 = pneg %p102
      %p193 = pneg %p99
      %p194 = scmp.lt.s32.totalorder %s19, 3
      %s195 = scalar_select %p194, %s19, 3
      %s196 = scalar_lea.vmem %s2, %s195
      %p197 = pneg %p128
      %p198 = pneg %p125
      %p199 = scmp.lt.s32.totalorder %s19, 3
      %s200 = scalar_select %p199, %s19, 3
      %s201 = scalar_lea.vmem %s3, %s200
      %s202 = smul.u32 16, %s19
      %p203 = scmp.lt.s32.totalorder %s202, 63
      %s204 = scalar_select %p203, %s202, 63
      %p205 = scmp.lt.s32.totalorder %s20, 0
      %s206 = scalar_select %p205, %s20, 0
      %s207 = sadd.s32 %s206, %s204
      %s208 = smul.addr %s207, 4
      %s209 = scalar_lea.vmem %s0, %s208
      %s210 = smul.u32 16, %s19
      %s211 = smul.u32 16, %s20
      %p212 = scmp.lt.s32.totalorder %s211, 15
      %s213 = scalar_select %p212, %s211, 15
      %s214 = smul.addr %s213, 4
      %s215 = scalar_lea.vmem %s1, %s214
      %s216 = smul.u32 16, %s20
      %p217 = scmp.lt.s32.totalorder %s19, 3
      %s218 = scalar_select %p217, %s19, 3
      %s219 = scalar_lea.vmem %s2, %s218
      %p220 = scmp.lt.s32.totalorder %s19, 3
      %s221 = scalar_select %p220, %s19, 3
      %s222 = scalar_lea.vmem %s3, %s221
      %p223 = scmp.eq.s32.totalorder %s20, 0
      // Predicated region
      $region29: #{conv_block_forward_nhwc.2} parent=27 // pred_check
        %p224 = pneg %p223
      $region30: #{conv_block_forward_nhwc.2} parent=27 // pred_check_branch
        %226 = sbr.rel (%p224) target = $region32
      $region31: #{conv_block_forward_nhwc.2} parent=27 // pred_region
        %227 = vst [vmem:[#allocation2] sm:$0xff] 0.0
        %228 = vst [vmem:[#allocation2 + $0x8] sm:$0xff] 0.0
        %229 = vst [vmem:[#allocation2 + $0x10] sm:$0xff] 0.0
        %230 = vst [vmem:[#allocation2 + $0x18] sm:$0xff] 0.0
        %231 = vst [vmem:[#allocation2 + $0x20] sm:$0xff] 0.0
        %232 = vst [vmem:[#allocation2 + $0x28] sm:$0xff] 0.0
        %233 = vst [vmem:[#allocation2 + $0x30] sm:$0xff] 0.0
        %234 = vst [vmem:[#allocation2 + $0x38] sm:$0xff] 0.0
        %235 = vst [vmem:[#allocation2 + $0x40] sm:$0xff] 0.0
        %236 = vst [vmem:[#allocation2 + $0x48] sm:$0xff] 0.0
        %237 = vst [vmem:[#allocation2 + $0x50] sm:$0xff] 0.0
        %238 = vst [vmem:[#allocation2 + $0x58] sm:$0xff] 0.0
        %239 = vst [vmem:[#allocation2 + $0x60] sm:$0xff] 0.0
        %240 = vst [vmem:[#allocation2 + $0x68] sm:$0xff] 0.0
        %241 = vst [vmem:[#allocation2 + $0x70] sm:$0xff] 0.0
        %242 = vst [vmem:[#allocation2 + $0x78] sm:$0xff] 0.0
      $region32: #{conv_block_forward_nhwc.2} parent=27 // pred_fallthru
        _
      %v243 = vld [vmem:[#allocation2] sm:$0xff]
      %v244 = vld [vmem:[#allocation2 + $0x8] sm:$0xff]
      %v245 = vld [vmem:[#allocation2 + $0x10] sm:$0xff]
      %v246 = vld [vmem:[#allocation2 + $0x18] sm:$0xff]
      %v247 = vld [vmem:[#allocation2 + $0x20] sm:$0xff]
      %v248 = vld [vmem:[#allocation2 + $0x28] sm:$0xff]
      %v249 = vld [vmem:[#allocation2 + $0x30] sm:$0xff]
      %v250 = vld [vmem:[#allocation2 + $0x38] sm:$0xff]
      %v251 = vld [vmem:[#allocation2 + $0x40] sm:$0xff]
      %v252 = vld [vmem:[#allocation2 + $0x48] sm:$0xff]
      %v253 = vld [vmem:[#allocation2 + $0x50] sm:$0xff]
      %v254 = vld [vmem:[#allocation2 + $0x58] sm:$0xff]
      %v255 = vld [vmem:[#allocation2 + $0x60] sm:$0xff]
      %v256 = vld [vmem:[#allocation2 + $0x68] sm:$0xff]
      %v257 = vld [vmem:[#allocation2 + $0x70] sm:$0xff]
      %v258 = vld [vmem:[#allocation2 + $0x78] sm:$0xff]
      %v259 = vld [vmem:[%s209] sm:$0xf]
      %v260 = vld [vmem:[%s209 + $0x4] sm:$0xf]
      %v261 = vld [vmem:[%s209 + $0x8] sm:$0xf]
      %v262 = vld [vmem:[%s209 + $0xc] sm:$0xf]
      %v263 = vld [vmem:[%s209 + $0x10] sm:$0xf]
      %v264 = vld [vmem:[%s209 + $0x14] sm:$0xf]
      %v265 = vld [vmem:[%s209 + $0x18] sm:$0xf]
      %v266 = vld [vmem:[%s209 + $0x1c] sm:$0xf]
      %v267 = vld [vmem:[%s209 + $0x20] sm:$0xf]
      %v268 = vld [vmem:[%s209 + $0x24] sm:$0xf]
      %v269 = vld [vmem:[%s209 + $0x28] sm:$0xf]
      %v270 = vld [vmem:[%s209 + $0x2c] sm:$0xf]
      %v271 = vld [vmem:[%s209 + $0x30] sm:$0xf]
      %v272 = vld [vmem:[%s209 + $0x34] sm:$0xf]
      %v273 = vld [vmem:[%s209 + $0x38] sm:$0xf]
      %v274 = vld [vmem:[%s209 + $0x3c] sm:$0xf]
      %v275 = vld [vmem:[%s215] sm:$0xf]
      %v276 = vld [vmem:[%s215 + $0x4] sm:$0xf]
      %v277 = vld [vmem:[%s215 + $0x8] sm:$0xf]
      %v278 = vld [vmem:[%s215 + $0xc] sm:$0xf]
      %v279 = vld [vmem:[%s215 + $0x10] sm:$0xf]
      %v280 = vld [vmem:[%s215 + $0x14] sm:$0xf]
      %v281 = vld [vmem:[%s215 + $0x18] sm:$0xf]
      %v282 = vld [vmem:[%s215 + $0x1c] sm:$0xf]
      %v283 = vld [vmem:[%s215 + $0x20] sm:$0xf]
      %v284 = vld [vmem:[%s215 + $0x24] sm:$0xf]
      %v285 = vld [vmem:[%s215 + $0x28] sm:$0xf]
      %v286 = vld [vmem:[%s215 + $0x2c] sm:$0xf]
      %v287 = vld [vmem:[%s215 + $0x30] sm:$0xf]
      %v288 = vld [vmem:[%s215 + $0x34] sm:$0xf]
      %v289 = vld [vmem:[%s215 + $0x38] sm:$0xf]
      %v290 = vld [vmem:[%s215 + $0x3c] sm:$0xf]
      %v307 = vunpack.c.l.b16 %v259
      %v308 = vunpack.c.l.b16 %v260
      %v309 = vunpack.c.l.b16 %v261
      %v310 = vunpack.c.l.b16 %v262
      %v311 = vunpack.c.l.b16 %v263
      %v312 = vunpack.c.l.b16 %v264
      %v313 = vunpack.c.l.b16 %v265
      %v314 = vunpack.c.l.b16 %v266
      %v315 = vunpack.c.l.b16 %v267
      %v316 = vunpack.c.l.b16 %v268
      %v317 = vunpack.c.l.b16 %v269
      %v318 = vunpack.c.l.b16 %v270
      %v319 = vunpack.c.l.b16 %v271
      %v320 = vunpack.c.l.b16 %v272
      %v321 = vunpack.c.l.b16 %v273
      %v322 = vunpack.c.l.b16 %v274
      %v323 = vpack.c.b16 %v308, %v307
      %v324 = vpack.c.b16 %v310, %v309
      %v325 = vpack.c.b16 %v312, %v311
      %v326 = vpack.c.b16 %v314, %v313
      %v327 = vpack.c.b16 %v316, %v315
      %v328 = vpack.c.b16 %v318, %v317
      %v329 = vpack.c.b16 %v320, %v319
      %v330 = vpack.c.b16 %v322, %v321
      %v355 = vunpack.c.l.b16 %v275
      %v356 = vunpack.c.l.b16 %v276
      %v357 = vunpack.c.l.b16 %v277
      %v358 = vunpack.c.l.b16 %v278
      %v359 = vunpack.c.l.b16 %v279
      %v360 = vunpack.c.l.b16 %v280
      %v361 = vunpack.c.l.b16 %v281
      %v362 = vunpack.c.l.b16 %v282
      %v363 = vunpack.c.l.b16 %v283
      %v364 = vunpack.c.l.b16 %v284
      %v365 = vunpack.c.l.b16 %v285
      %v366 = vunpack.c.l.b16 %v286
      %v367 = vunpack.c.l.b16 %v287
      %v368 = vunpack.c.l.b16 %v288
      %v369 = vunpack.c.l.b16 %v289
      %v370 = vunpack.c.l.b16 %v290
      %v371 = vpack.c.b16 %v356, %v355
      %v372 = vpack.c.b16 %v358, %v357
      %v373 = vpack.c.b16 %v360, %v359
      %v374 = vpack.c.b16 %v362, %v361
      %v375 = vpack.c.b16 %v364, %v363
      %v376 = vpack.c.b16 %v366, %v365
      %v377 = vpack.c.b16 %v368, %v367
      %v378 = vpack.c.b16 %v370, %v369
      %387 = vmatpush.bf16.msra.mxu0 %v378
      %388 = vmatpush.bf16.msra.mxu0 %v377
      %389 = vmatpush.bf16.msra.mxu0 %v376
      %390 = vmatpush.bf16.msra.mxu0 %v375
      %391 = vmatpush.bf16.msra.mxu0 %v374
      %392 = vmatpush.bf16.msra.mxu0 %v373
      %393 = vmatpush.bf16.msra.mxu0 %v372
      %394 = vmatpush.bf16.msra.mxu0 %v371
      %395 = vmatmul.bf16.gmra.mxu0 %v323
      %v396 = vpop.f32.mrf.mxu0
      %v397 = vadd.f32 0.0, %v396
      %v398 = vpop.f32.mrf.mxu0
      %v399 = vadd.f32 0.0, %v398
      %400 = vmatmul.bf16.gmra.mxu0 %v324
      %v401 = vpop.f32.mrf.mxu0
      %v402 = vadd.f32 0.0, %v401
      %v403 = vpop.f32.mrf.mxu0
      %v404 = vadd.f32 0.0, %v403
      %405 = vmatmul.bf16.gmra.mxu0 %v325
      %v406 = vpop.f32.mrf.mxu0
      %v407 = vadd.f32 0.0, %v406
      %v408 = vpop.f32.mrf.mxu0
      %v409 = vadd.f32 0.0, %v408
      %410 = vmatmul.bf16.gmra.mxu0 %v326
      %v411 = vpop.f32.mrf.mxu0
      %v412 = vadd.f32 0.0, %v411
      %v413 = vpop.f32.mrf.mxu0
      %v414 = vadd.f32 0.0, %v413
      %415 = vmatmul.bf16.gmra.mxu0 %v327
      %v416 = vpop.f32.mrf.mxu0
      %v417 = vadd.f32 0.0, %v416
      %v418 = vpop.f32.mrf.mxu0
      %v419 = vadd.f32 0.0, %v418
      %420 = vmatmul.bf16.gmra.mxu0 %v328
      %v421 = vpop.f32.mrf.mxu0
      %v422 = vadd.f32 0.0, %v421
      %v423 = vpop.f32.mrf.mxu0
      %v424 = vadd.f32 0.0, %v423
      %425 = vmatmul.bf16.gmra.mxu0 %v329
      %v426 = vpop.f32.mrf.mxu0
      %v427 = vadd.f32 0.0, %v426
      %v428 = vpop.f32.mrf.mxu0
      %v429 = vadd.f32 0.0, %v428
      %430 = vmatmul.bf16.gmra.mxu0 %v330
      %v431 = vpop.f32.mrf.mxu0
      %v432 = vadd.f32 0.0, %v431
      %v433 = vpop.f32.mrf.mxu0
      %v434 = vadd.f32 0.0, %v433
      %435 = vdwg.mxu0
      %v436 = vadd.f32 %v243, %v397
      %v437 = vadd.f32 %v244, %v399
      %v438 = vadd.f32 %v245, %v402
      %v439 = vadd.f32 %v246, %v404
      %v440 = vadd.f32 %v247, %v407
      %v441 = vadd.f32 %v248, %v409
      %v442 = vadd.f32 %v249, %v412
      %v443 = vadd.f32 %v250, %v414
      %v444 = vadd.f32 %v251, %v417
      %v445 = vadd.f32 %v252, %v419
      %v446 = vadd.f32 %v253, %v422
      %v447 = vadd.f32 %v254, %v424
      %v448 = vadd.f32 %v255, %v427
      %v449 = vadd.f32 %v256, %v429
      %v450 = vadd.f32 %v257, %v432
      %v451 = vadd.f32 %v258, %v434
      %452 = vst [vmem:[#allocation2] sm:$0xff] %v436
      %453 = vst [vmem:[#allocation2 + $0x8] sm:$0xff] %v437
      %454 = vst [vmem:[#allocation2 + $0x10] sm:$0xff] %v438
      %455 = vst [vmem:[#allocation2 + $0x18] sm:$0xff] %v439
      %456 = vst [vmem:[#allocation2 + $0x20] sm:$0xff] %v440
      %457 = vst [vmem:[#allocation2 + $0x28] sm:$0xff] %v441
      %458 = vst [vmem:[#allocation2 + $0x30] sm:$0xff] %v442
      %459 = vst [vmem:[#allocation2 + $0x38] sm:$0xff] %v443
      %460 = vst [vmem:[#allocation2 + $0x40] sm:$0xff] %v444
      %461 = vst [vmem:[#allocation2 + $0x48] sm:$0xff] %v445
      %462 = vst [vmem:[#allocation2 + $0x50] sm:$0xff] %v446
      %463 = vst [vmem:[#allocation2 + $0x58] sm:$0xff] %v447
      %464 = vst [vmem:[#allocation2 + $0x60] sm:$0xff] %v448
      %465 = vst [vmem:[#allocation2 + $0x68] sm:$0xff] %v449
      %466 = vst [vmem:[#allocation2 + $0x70] sm:$0xff] %v450
      %467 = vst [vmem:[#allocation2 + $0x78] sm:$0xff] %v451
      // Predicated region
      $region33: #{conv_block_forward_nhwc.2} parent=27 // pred_check
        %p468 = pneg %p223
      $region34: #{conv_block_forward_nhwc.2} parent=27 // pred_check_branch
        %470 = sbr.rel (%p468) target = $region36
      $region35: #{conv_block_forward_nhwc.2} parent=27 // pred_region
        %v471 = vld [vmem:[#allocation2] sm:$0xff]
        %v472 = vld [vmem:[#allocation2 + $0x8] sm:$0xff]
        %v473 = vld [vmem:[#allocation2 + $0x10] sm:$0xff]
        %v474 = vld [vmem:[#allocation2 + $0x18] sm:$0xff]
        %v475 = vld [vmem:[#allocation2 + $0x20] sm:$0xff]
        %v476 = vld [vmem:[#allocation2 + $0x28] sm:$0xff]
        %v477 = vld [vmem:[#allocation2 + $0x30] sm:$0xff]
        %v478 = vld [vmem:[#allocation2 + $0x38] sm:$0xff]
        %v479 = vld [vmem:[#allocation2 + $0x40] sm:$0xff]
        %v480 = vld [vmem:[#allocation2 + $0x48] sm:$0xff]
        %v481 = vld [vmem:[#allocation2 + $0x50] sm:$0xff]
        %v482 = vld [vmem:[#allocation2 + $0x58] sm:$0xff]
        %v483 = vld [vmem:[#allocation2 + $0x60] sm:$0xff]
        %v484 = vld [vmem:[#allocation2 + $0x68] sm:$0xff]
        %v485 = vld [vmem:[#allocation2 + $0x70] sm:$0xff]
        %v486 = vld [vmem:[#allocation2 + $0x78] sm:$0xff]
        %v487 = vadd.f32 %v471, %v472
        %v488 = vadd.f32 %v487, %v473
        %v489 = vadd.f32 %v488, %v474
        %v490 = vadd.f32 %v489, %v475
        %v491 = vadd.f32 %v490, %v476
        %v492 = vadd.f32 %v491, %v477
        %v493 = vadd.f32 %v492, %v478
        %v494 = vadd.f32 %v493, %v479
        %v495 = vadd.f32 %v494, %v480
        %v496 = vadd.f32 %v495, %v481
        %v497 = vadd.f32 %v496, %v482
        %v498 = vadd.f32 %v497, %v483
        %v499 = vadd.f32 %v498, %v484
        %v500 = vadd.f32 %v499, %v485
        %v501 = vadd.f32 %v500, %v486
        %v502 = vrot.slane %v501, 4
        %v503 = vadd.f32 %v501, %v502
        %v504 = vrot.slane %v503, 2
        %v505 = vadd.f32 %v503, %v504
        %v506 = vrot.slane %v505, 1
        %v507 = vadd.f32 %v505, %v506
        %508 = vst [vmem:[%s219] sm:$0x1] %v507
        %v509 = vmul.f32 %v471, %v471
        %v510 = vmul.f32 %v472, %v472
        %v511 = vmul.f32 %v473, %v473
        %v512 = vmul.f32 %v474, %v474
        %v513 = vmul.f32 %v475, %v475
        %v514 = vmul.f32 %v476, %v476
        %v515 = vmul.f32 %v477, %v477
        %v516 = vmul.f32 %v478, %v478
        %v517 = vmul.f32 %v479, %v479
        %v518 = vmul.f32 %v480, %v480
        %v519 = vmul.f32 %v481, %v481
        %v520 = vmul.f32 %v482, %v482
        %v521 = vmul.f32 %v483, %v483
        %v522 = vmul.f32 %v484, %v484
        %v523 = vmul.f32 %v485, %v485
        %v524 = vmul.f32 %v486, %v486
        %v525 = vadd.f32 %v509, %v510
        %v526 = vadd.f32 %v525, %v511
        %v527 = vadd.f32 %v526, %v512
        %v528 = vadd.f32 %v527, %v513
        %v529 = vadd.f32 %v528, %v514
        %v530 = vadd.f32 %v529, %v515
        %v531 = vadd.f32 %v530, %v516
        %v532 = vadd.f32 %v531, %v517
        %v533 = vadd.f32 %v532, %v518
        %v534 = vadd.f32 %v533, %v519
        %v535 = vadd.f32 %v534, %v520
        %v536 = vadd.f32 %v535, %v521
        %v537 = vadd.f32 %v536, %v522
        %v538 = vadd.f32 %v537, %v523
        %v539 = vadd.f32 %v538, %v524
        %v540 = vrot.slane %v539, 4
        %v541 = vadd.f32 %v539, %v540
        %v542 = vrot.slane %v541, 2
        %v543 = vadd.f32 %v541, %v542
        %v544 = vrot.slane %v543, 1
        %v545 = vadd.f32 %v543, %v544
        %546 = vst [vmem:[%s222] sm:$0x1] %v545
      $region36: #{conv_block_forward_nhwc.2} parent=27 // pred_fallthru
        _
      %p547 = scmp.lt.s32.totalorder %s19, 3
      %s548 = scalar_select %p547, %s19, 3
      %s549 = scalar_lea.vmem %s2, %s548
      %p550 = scmp.lt.s32.totalorder %s19, 3
      %s551 = scalar_select %p550, %s19, 3
      %s552 = scalar_lea.vmem %s3, %s551
      // Predicated region
      $region37: #{conv_block_forward_nhwc.2} parent=27 // pred_check
        %p553 = pneg %p99
      $region38: #{conv_block_forward_nhwc.2} parent=27 // pred_check_branch
        %555 = sbr.rel (%p553) target = $region40
      $region39: #{conv_block_forward_nhwc.2} parent=27 // pred_region
        _
      $region40: #{conv_block_forward_nhwc.2} parent=27 // pred_fallthru
        _
      // Predicated region
      $region41: #{conv_block_forward_nhwc.2} parent=27 // pred_check
        %p556 = pneg %p125
      $region42: #{conv_block_forward_nhwc.2} parent=27 // pred_check_branch
        %558 = sbr.rel (%p556) target = $region44
      $region43: #{conv_block_forward_nhwc.2} parent=27 // pred_region
        _
      $region44: #{conv_block_forward_nhwc.2} parent=27 // pred_fallthru
        _
    $region28: #{conv_block_forward_nhwc.2} parent=5 // pred_fallthru
      _
    %p559 = scmp.le.s32.totalorder 2, %s10
    // Predicated region
    $region45: #{conv_block_forward_nhwc.2} parent=5 // pred_check
      %p560 = pneg %p559
    $region46: #{conv_block_forward_nhwc.2} parent=5 // pred_check_branch
      %562 = sbr.rel (%p560) target = $region48
    $region47: #{conv_block_forward_nhwc.2} parent=5 // pred_region
      %s563 = ssub.s32 %s10, 2
      // Predicated region
      $region49: #{conv_block_forward_nhwc.2} parent=47 // pred_check
        %p564 = pneg %p105
      $region50: #{conv_block_forward_nhwc.2} parent=47 // pred_check_branch
        %566 = sbr.rel (%p564) target = $region52
      $region51: #{conv_block_forward_nhwc.2} parent=47 // pred_region
        %p567 = scmp.lt.s32.totalorder %s21, 3
        %s568 = scalar_select %p567, %s21, 3
        %s569 = scalar_lea.vmem %s2, %s568
      $region52: #{conv_block_forward_nhwc.2} parent=47 // pred_fallthru
        _
      // Predicated region
      $region53: #{conv_block_forward_nhwc.2} parent=47 // pred_check
        %p570 = pneg %p131
      $region54: #{conv_block_forward_nhwc.2} parent=47 // pred_check_branch
        %572 = sbr.rel (%p570) target = $region56
      $region55: #{conv_block_forward_nhwc.2} parent=47 // pred_region
        %p573 = scmp.lt.s32.totalorder %s21, 3
        %s574 = scalar_select %p573, %s21, 3
        %s575 = scalar_lea.vmem %s3, %s574
      $region56: #{conv_block_forward_nhwc.2} parent=47 // pred_fallthru
        _
    $region48: #{conv_block_forward_nhwc.2} parent=5 // pred_fallthru
      _
  $region6: #{conv_block_forward_nhwc.2} parent=0 // loop_footer
    %s14 = sadd.s32 1, %s10
  $region7: #{conv_block_forward_nhwc.2} parent=0 // loop_footer_branch
    %9 = sbr.rel target = $region3
  $region8: #{conv_block_forward_nhwc.2} parent=0 // loop_exit
    _

</llo_original>
